<compile_context>
chip_gen: v5e
topology: v5e:2x2
jax: 0.10.0
libtpu: 0.0.40
codegen_flags: <defaults>
</compile_context>

<pallas_src>
import functools

import jax
import jax.numpy as jnp
from jax.experimental import pallas as pl
from jax.experimental.pallas import tpu as pltpu


def _cdiv(a, b):
    return -(-a // b)


def _round_up(v, m):
    return _cdiv(v, m) * m


def _conv_tile(wt_ref, xa_ref, xb_ref, *, offsets, lane_tile, halo, cp):
    """Depthwise-dilated + 1x1 conv for one (TC, lane_tile) output tile.

    wt_ref : (K2, TC, CP)   per-tap fused weights  W[k, o, c] = pw[o,c]*dw[c,k]
    xa_ref : (CP, LT)       current lane block of the flat padded input
    xb_ref : (CP, LT)       next lane block (halo source)
    Returns (TC, LT) float32.
    """
    xa = xa_ref[...]
    if halo > 0:
        xw = jnp.concatenate([xa, xb_ref[:, :halo]], axis=1)  # (CP, LT+halo)
    else:
        xw = xa
    acc = None
    for k, ok in enumerate(offsets):              # static python loop over taps
        xk = jax.lax.slice(xw, (0, ok), (cp, ok + lane_tile))   # (CP, LT)
        yk = jnp.dot(wt_ref[k], xk, preferred_element_type=jnp.float32)
        acc = yk if acc is None else acc + yk
    return acc


def _bn_stats_kernel(wt_ref, xa_ref, xb_ref, m_ref, scale_ref, shift_ref,
                     s_acc, ss_acc, *, offsets, lane_tile, halo, cp,
                     n_valid, eps):
    j = pl.program_id(1)

    @pl.when(j == 0)
    def _():
        s_acc[...] = jnp.zeros_like(s_acc)
        ss_acc[...] = jnp.zeros_like(ss_acc)

    y = _conv_tile(wt_ref, xa_ref, xb_ref, offsets=offsets,
                   lane_tile=lane_tile, halo=halo, cp=cp)        # (TC, LT) f32
    ym = y * m_ref[...]                       # mask out padded / invalid columns
    s_acc[...] += jnp.sum(ym, axis=1, keepdims=True)
    ss_acc[...] += jnp.sum(ym * y, axis=1, keepdims=True)

    @pl.when(j == pl.num_programs(1) - 1)
    def _():
        inv_n = 1.0 / n_valid
        mean = s_acc[...] * inv_n
        # Single-pass E[y^2]-mean^2 in f32 (clamped); mean is O(std) here so
        # cancellation is benign.
        var = jnp.maximum(ss_acc[...] * inv_n - mean * mean, 0.0)
        inv_std = jax.lax.rsqrt(var + eps)
        scale_ref[...] = inv_std
        shift_ref[...] = -mean * inv_std


def _conv_bn_relu_kernel(wt_ref, xa_ref, xb_ref, sc_ref, sh_ref, o_ref,
                         *, offsets, lane_tile, halo, cp):
    y = _conv_tile(wt_ref, xa_ref, xb_ref, offsets=offsets,
                   lane_tile=lane_tile, halo=halo, cp=cp)        # (TC, LT) f32
    # Folded BN + ReLU: one scale/shift pass.
    o_ref[...] = jnp.maximum(y * sc_ref[...] + sh_ref[...], 0.0).astype(o_ref.dtype)


def atr_conv(x, dw_weight, pw_weight, *, stride=1, padding=2, dilation=2,
             eps=1e-5, use_bf16=True, out_dtype=jnp.float32,
             vmem_budget_bytes=24 << 20):
    """x: (N, C_in, H, W).  dw_weight: (C_in, 1, K, K) or (C_in, K, K).
    pw_weight: (C_out, C_in, 1, 1) or (C_out, C_in)."""
    N, C_in, H, W = x.shape
    KH, KW = dw_weight.shape[-2], dw_weight.shape[-1]
    K2 = KH * KW
    dw = dw_weight.reshape(C_in, K2)                  # [c, k], k = kh*KW + kw
    C_out = pw_weight.shape[0]
    pw = pw_weight.reshape(C_out, C_in)

    Hp, Wp = H + 2 * padding, W + 2 * padding
    Ho = (H + 2 * padding - dilation * (KH - 1) - 1) // stride + 1
    Wo = (W + 2 * padding - dilation * (KW - 1) - 1) // stride + 1
    NS = N * Ho * Wo
    HpWp = Hp * Wp
    L_need = N * HpWp                                 # dense flat output columns

    cdtype = jnp.bfloat16 if use_bf16 else jnp.float32
    ib = 2 if use_bf16 else 4
    ob = jnp.dtype(out_dtype).itemsize
    cp = _round_up(C_in, 16 if use_bf16 else 8)       # sublane packing

    # Tap offsets in the flattened per-image padded grid.
    offsets = tuple(kh * dilation * Wp + kw * dilation
                    for kh in range(KH) for kw in range(KW))
    max_off = max(offsets)
    halo = _round_up(max_off, 128) if max_off > 0 else 0

    # C_out tile: largest divisor that still yields >=2 channel-grid steps
    # (keeps both v7x TensorCores busy); fall back to the full C_out.
    tc = C_out
    for cand in (256, 128, 64, 32, 16, 8):
        if C_out % cand == 0 and C_out // cand >= 2:
            tc = cand
            break
    n_c = C_out // tc

    # Lane tile sized against a VMEM budget (v7x-safe: 64 MiB physical).
    per_col = (4 * cp * ib        # xa + xb, double-buffered
               + 8                # mask, double-buffered
               + 2 * tc * ob      # output block, double-buffered
               + 2 * cp * ib      # in-kernel window / tap-slice temporaries
               + 2 * tc * 4)      # f32 conv result + elementwise temp
    budget_cols = max(128, (vmem_budget_bytes // per_col) // 128 * 128)
    lt = min(_round_up(_cdiv(L_need, 2), 128), budget_cols, 8192)
    lt = max(lt, 128, halo)
    n_l = _cdiv(L_need, lt)
    L_total = n_l * lt
    x_cols = (n_l + 1) * lt       # extra lane block so the j+1 halo fetch exists

    # ---- wrapper-side layout (ONE copy of x, no replication) ----
    xp = jnp.pad(x, ((0, 0), (0, 0), (padding, padding), (padding, padding)))
    xf = xp.transpose(1, 0, 2, 3).reshape(C_in, L_need)
    xf = jnp.pad(xf, ((0, cp - C_in), (0, x_cols - L_need))).astype(cdtype)

    # Per-tap fused weights: W_taps[k, o, c] = pw[o, c] * dw[c, k].
    w_taps = pw[None, :, :] * dw.T[:, None, :]
    w_taps = jnp.pad(w_taps, ((0, 0), (0, 0), (0, cp - C_in))).astype(cdtype)

    # Validity mask over the dense flat grid (handles padding rows/cols,
    # stride subsampling and the tail padding of the lane axis).
    g = jnp.arange(L_total, dtype=jnp.int32)
    i = g % HpWp
    ho_s = i // Wp
    wo_s = i % Wp
    valid = ((g < L_need)
             & (ho_s % stride == 0) & (ho_s < (Ho - 1) * stride + 1)
             & (wo_s % stride == 0) & (wo_s < (Wo - 1) * stride + 1))
    mask = valid.astype(jnp.float32).reshape(1, L_total)

    grid = (n_c, n_l)
    wt_spec = pl.BlockSpec((K2, tc, cp), lambda c, j: (0, c, 0))
    xa_spec = pl.BlockSpec((cp, lt), lambda c, j: (0, j))
    xb_spec = pl.BlockSpec((cp, lt), lambda c, j: (0, j + 1))
    m_spec = pl.BlockSpec((1, lt), lambda c, j: (0, j))
    st_spec = pl.BlockSpec((tc, 1), lambda c, j: (c, 0))

    conv_flops = 2 * K2 * cp * C_out * L_total
    x_bytes = 2 * cp * L_total * ib + K2 * C_out * cp * ib

    # ---- pass 1: global BN statistics (lane axis = reduction, "arbitrary") ----
    stats_kernel = functools.partial(
        _bn_stats_kernel, offsets=offsets, lane_tile=lt, halo=halo, cp=cp,
        n_valid=float(NS), eps=eps)
    scale, shift = pl.pallas_call(
        stats_kernel,
        out_shape=(jax.ShapeDtypeStruct((C_out, 1), jnp.float32),
                   jax.ShapeDtypeStruct((C_out, 1), jnp.float32)),
        grid=grid,
        in_specs=[wt_spec, xa_spec, xb_spec, m_spec],
        out_specs=(st_spec, st_spec),
        scratch_shapes=[pltpu.VMEM((tc, 1), jnp.float32),
                        pltpu.VMEM((tc, 1), jnp.float32)],
        compiler_params=pltpu.CompilerParams(
            dimension_semantics=("parallel", "arbitrary"),
            vmem_limit_bytes=48 << 20),
        cost_estimate=pl.CostEstimate(
            flops=conv_flops + 5 * C_out * L_total,
            transcendentals=C_out,
            bytes_accessed=x_bytes + 4 * L_total + 8 * C_out),
    )(w_taps, xf, xf, mask)

    # ---- pass 2: recompute conv tile (cheap) + folded normalize + ReLU ----
    norm_kernel = functools.partial(
        _conv_bn_relu_kernel, offsets=offsets, lane_tile=lt, halo=halo, cp=cp)
    y_flat = pl.pallas_call(
        norm_kernel,
        out_shape=jax.ShapeDtypeStruct((C_out, L_total), out_dtype),
        grid=grid,
        in_specs=[wt_spec, xa_spec, xb_spec, st_spec, st_spec],
        out_specs=pl.BlockSpec((tc, lt), lambda c, j: (c, j)),
        compiler_params=pltpu.CompilerParams(
            dimension_semantics=("parallel", "parallel"),
            vmem_limit_bytes=48 << 20),
        cost_estimate=pl.CostEstimate(
            flops=conv_flops + 3 * C_out * L_total,
            transcendentals=0,
            bytes_accessed=x_bytes + 8 * C_out + C_out * L_total * ob),
    )(w_taps, xf, xf, scale, shift)

    # ---- wrapper-side extraction of valid columns, back to NCHW ----
    y = y_flat[:, :L_need].reshape(C_out, N, Hp, Wp)
    y = y[:, :, 0:(Ho - 1) * stride + 1:stride, 0:(Wo - 1) * stride + 1:stride]
    # TODO(synk): return channel-major (C_out, N, Ho, Wo) when the consumer
    # allows it and skip this transpose (extra HBM read+write of the output).
    return y.transpose(1, 0, 2, 3)


def ref_atr_conv(x, dw_weight_oihw, pw_weight_oihw, stride, padding, dilation,
                 eps=1e-5):
    """Pure-JAX reference matching the PyTorch module (training-mode BN)."""
    C_in = x.shape[1]
    y = jax.lax.conv_general_dilated(
        x, dw_weight_oihw, window_strides=(stride, stride),
        padding=[(padding, padding), (padding, padding)],
        rhs_dilation=(dilation, dilation),
        dimension_numbers=("NCHW", "OIHW", "NCHW"),
        feature_group_count=C_in)
    y = jax.lax.conv_general_dilated(
        y, pw_weight_oihw, window_strides=(1, 1), padding="VALID",
        dimension_numbers=("NCHW", "OIHW", "NCHW"))
    mean = jnp.mean(y, axis=(0, 2, 3), keepdims=True)
    var = jnp.mean(jnp.square(y - mean), axis=(0, 2, 3), keepdims=True)
    return jnp.maximum((y - mean) * jax.lax.rsqrt(var + eps), 0.0)


if __name__ == "__main__":
    # Small shapes consistent with the module: C_in=4, C_out=8, 3x3 atrous conv.
    N, C_in, C_out, H, W = 2, 4, 8, 16, 16
    kernel_size, stride, padding, dilation = 3, 1, 2, 2

    key = jax.random.PRNGKey(0)
    kx, kdw, kpw = jax.random.split(key, 3)
    x = jax.random.normal(kx, (N, C_in, H, W), jnp.float32)
    # PyTorch weight shapes: (C_in, 1, K, K) depthwise, (C_out, C_in, 1, 1) pointwise.
    dw_w = jax.random.normal(kdw, (C_in, 1, kernel_size, kernel_size), jnp.float32) * 0.3
    pw_w = jax.random.normal(kpw, (C_out, C_in, 1, 1), jnp.float32) * 0.3

    ref = ref_atr_conv(x, dw_w, pw_w, stride, padding, dilation)

    # f32 path: tight correctness check against the f32 reference.
    run_f32 = jax.jit(functools.partial(
        atr_conv, stride=stride, padding=padding, dilation=dilation,
        use_bf16=False))
    out_f32 = jax.block_until_ready(run_f32(x, dw_w, pw_w))
    assert out_f32.shape == ref.shape, (out_f32.shape, ref.shape)
    err_f32 = float(jnp.max(jnp.abs(out_f32 - ref)))
    assert err_f32 < 1e-4, err_f32

    # Default bf16-operand path (f32 accumulation / f32 BN): looser tolerance.
    run_bf16 = jax.jit(functools.partial(
        atr_conv, stride=stride, padding=padding, dilation=dilation,
        use_bf16=True))
    out_bf16 = jax.block_until_ready(run_bf16(x, dw_w, pw_w))
    err_bf16 = float(jnp.max(jnp.abs(out_bf16 - ref)))
    assert err_bf16 < 1e-1, err_bf16

    print("KERNEL_OK")
</pallas_src>

<mosaic_0001>
module attributes {stable_mosaic.version = 11 : i64} {
  func.func @_conv_bn_relu_kernel(%arg0: i32, %arg1: i32, %arg2: memref<9x8x8xf32, #tpu.memory_space<vmem>>, %arg3: memref<8x512xf32, #tpu.memory_space<vmem>>, %arg4: memref<8x512xf32, #tpu.memory_space<vmem>>, %arg5: memref<8x1xf32, #tpu.memory_space<vmem>>, %arg6: memref<8x1xf32, #tpu.memory_space<vmem>>, %arg7: memref<8x512xf32, #tpu.memory_space<vmem>>) attributes {dimension_semantics = [#tpu.dimension_semantics<parallel>, #tpu.dimension_semantics<parallel>], iteration_bounds = array<i64: 1, 2>, scalar_prefetch = 0 : i64, scratch_operands = 0 : i64, tpu.core_type = #tpu.core_type<tc>, window_params = [{transform_indices = @transform_0, window_bounds = array<i64: 9, 8, 8>}, {transform_indices = @transform_1, window_bounds = array<i64: 8, 512>}, {transform_indices = @transform_2, window_bounds = array<i64: 8, 512>}, {transform_indices = @transform_3, window_bounds = array<i64: 8, 1>}, {transform_indices = @transform_4, window_bounds = array<i64: 8, 1>}, {transform_indices = @transform_5, window_bounds = array<i64: 8, 512>}]} {
    %c0 = arith.constant 0 : index
    %c0_0 = arith.constant 0 : index
    %0 = vector.load %arg3[%c0, %c0_0] : memref<8x512xf32, #tpu.memory_space<vmem>>, vector<8x512xf32>
    %c0_1 = arith.constant 0 : index
    %c0_2 = arith.constant 0 : index
    %1 = vector.load %arg4[%c0_1, %c0_2] : memref<8x512xf32, #tpu.memory_space<vmem>>, vector<8x128xf32>
    %2 = tpu.concatenate %0, %1 in 1 : vector<8x512xf32>, vector<8x128xf32> -> vector<8x640xf32>
    %3 = vector.extract_strided_slice %2 {offsets = [0, 0], sizes = [8, 512], strides = [1, 1]} : vector<8x640xf32> to vector<8x512xf32>
    %c0_3 = arith.constant 0 : index
    %c0_4 = arith.constant 0 : index
    %c0_5 = arith.constant 0 : index
    %4 = vector.load %arg2[%c0_3, %c0_4, %c0_5] : memref<9x8x8xf32, #tpu.memory_space<vmem>>, vector<1x8x8xf32>
    %5 = vector.shape_cast %4 : vector<1x8x8xf32> to vector<8x8xf32>
    %cst = arith.constant dense<0.000000e+00> : vector<8x512xf32>
    %6 = tpu.matmul %5, %3, %cst {dimension_numbers = #tpu.dot_dimension_numbers<[1], [0], [0], [1], [0, 0, 1, 1], [], []>} : vector<8x8xf32>, vector<8x512xf32>, vector<8x512xf32> -> vector<8x512xf32>
    %7 = vector.extract_strided_slice %2 {offsets = [0, 2], sizes = [8, 512], strides = [1, 1]} : vector<8x640xf32> to vector<8x512xf32>
    %c1 = arith.constant 1 : index
    %c0_6 = arith.constant 0 : index
    %c0_7 = arith.constant 0 : index
    %8 = vector.load %arg2[%c1, %c0_6, %c0_7] : memref<9x8x8xf32, #tpu.memory_space<vmem>>, vector<1x8x8xf32>
    %9 = vector.shape_cast %8 : vector<1x8x8xf32> to vector<8x8xf32>
    %cst_8 = arith.constant dense<0.000000e+00> : vector<8x512xf32>
    %10 = tpu.matmul %9, %7, %cst_8 {dimension_numbers = #tpu.dot_dimension_numbers<[1], [0], [0], [1], [0, 0, 1, 1], [], []>} : vector<8x8xf32>, vector<8x512xf32>, vector<8x512xf32> -> vector<8x512xf32>
    %11 = arith.addf %6, %10 : vector<8x512xf32>
    %12 = vector.extract_strided_slice %2 {offsets = [0, 4], sizes = [8, 512], strides = [1, 1]} : vector<8x640xf32> to vector<8x512xf32>
    %c2 = arith.constant 2 : index
    %c0_9 = arith.constant 0 : index
    %c0_10 = arith.constant 0 : index
    %13 = vector.load %arg2[%c2, %c0_9, %c0_10] : memref<9x8x8xf32, #tpu.memory_space<vmem>>, vector<1x8x8xf32>
    %14 = vector.shape_cast %13 : vector<1x8x8xf32> to vector<8x8xf32>
    %cst_11 = arith.constant dense<0.000000e+00> : vector<8x512xf32>
    %15 = tpu.matmul %14, %12, %cst_11 {dimension_numbers = #tpu.dot_dimension_numbers<[1], [0], [0], [1], [0, 0, 1, 1], [], []>} : vector<8x8xf32>, vector<8x512xf32>, vector<8x512xf32> -> vector<8x512xf32>
    %16 = arith.addf %11, %15 : vector<8x512xf32>
    %17 = vector.extract_strided_slice %2 {offsets = [0, 40], sizes = [8, 512], strides = [1, 1]} : vector<8x640xf32> to vector<8x512xf32>
    %c3 = arith.constant 3 : index
    %c0_12 = arith.constant 0 : index
    %c0_13 = arith.constant 0 : index
    %18 = vector.load %arg2[%c3, %c0_12, %c0_13] : memref<9x8x8xf32, #tpu.memory_space<vmem>>, vector<1x8x8xf32>
    %19 = vector.shape_cast %18 : vector<1x8x8xf32> to vector<8x8xf32>
    %cst_14 = arith.constant dense<0.000000e+00> : vector<8x512xf32>
    %20 = tpu.matmul %19, %17, %cst_14 {dimension_numbers = #tpu.dot_dimension_numbers<[1], [0], [0], [1], [0, 0, 1, 1], [], []>} : vector<8x8xf32>, vector<8x512xf32>, vector<8x512xf32> -> vector<8x512xf32>
    %21 = arith.addf %16, %20 : vector<8x512xf32>
    %22 = vector.extract_strided_slice %2 {offsets = [0, 42], sizes = [8, 512], strides = [1, 1]} : vector<8x640xf32> to vector<8x512xf32>
    %c4 = arith.constant 4 : index
    %c0_15 = arith.constant 0 : index
    %c0_16 = arith.constant 0 : index
    %23 = vector.load %arg2[%c4, %c0_15, %c0_16] : memref<9x8x8xf32, #tpu.memory_space<vmem>>, vector<1x8x8xf32>
    %24 = vector.shape_cast %23 : vector<1x8x8xf32> to vector<8x8xf32>
    %cst_17 = arith.constant dense<0.000000e+00> : vector<8x512xf32>
    %25 = tpu.matmul %24, %22, %cst_17 {dimension_numbers = #tpu.dot_dimension_numbers<[1], [0], [0], [1], [0, 0, 1, 1], [], []>} : vector<8x8xf32>, vector<8x512xf32>, vector<8x512xf32> -> vector<8x512xf32>
    %26 = arith.addf %21, %25 : vector<8x512xf32>
    %27 = vector.extract_strided_slice %2 {offsets = [0, 44], sizes = [8, 512], strides = [1, 1]} : vector<8x640xf32> to vector<8x512xf32>
    %c5 = arith.constant 5 : index
    %c0_18 = arith.constant 0 : index
    %c0_19 = arith.constant 0 : index
    %28 = vector.load %arg2[%c5, %c0_18, %c0_19] : memref<9x8x8xf32, #tpu.memory_space<vmem>>, vector<1x8x8xf32>
    %29 = vector.shape_cast %28 : vector<1x8x8xf32> to vector<8x8xf32>
    %cst_20 = arith.constant dense<0.000000e+00> : vector<8x512xf32>
    %30 = tpu.matmul %29, %27, %cst_20 {dimension_numbers = #tpu.dot_dimension_numbers<[1], [0], [0], [1], [0, 0, 1, 1], [], []>} : vector<8x8xf32>, vector<8x512xf32>, vector<8x512xf32> -> vector<8x512xf32>
    %31 = arith.addf %26, %30 : vector<8x512xf32>
    %32 = vector.extract_strided_slice %2 {offsets = [0, 80], sizes = [8, 512], strides = [1, 1]} : vector<8x640xf32> to vector<8x512xf32>
    %c6 = arith.constant 6 : index
    %c0_21 = arith.constant 0 : index
    %c0_22 = arith.constant 0 : index
    %33 = vector.load %arg2[%c6, %c0_21, %c0_22] : memref<9x8x8xf32, #tpu.memory_space<vmem>>, vector<1x8x8xf32>
    %34 = vector.shape_cast %33 : vector<1x8x8xf32> to vector<8x8xf32>
    %cst_23 = arith.constant dense<0.000000e+00> : vector<8x512xf32>
    %35 = tpu.matmul %34, %32, %cst_23 {dimension_numbers = #tpu.dot_dimension_numbers<[1], [0], [0], [1], [0, 0, 1, 1], [], []>} : vector<8x8xf32>, vector<8x512xf32>, vector<8x512xf32> -> vector<8x512xf32>
    %36 = arith.addf %31, %35 : vector<8x512xf32>
    %37 = vector.extract_strided_slice %2 {offsets = [0, 82], sizes = [8, 512], strides = [1, 1]} : vector<8x640xf32> to vector<8x512xf32>
    %c7 = arith.constant 7 : index
    %c0_24 = arith.constant 0 : index
    %c0_25 = arith.constant 0 : index
    %38 = vector.load %arg2[%c7, %c0_24, %c0_25] : memref<9x8x8xf32, #tpu.memory_space<vmem>>, vector<1x8x8xf32>
    %39 = vector.shape_cast %38 : vector<1x8x8xf32> to vector<8x8xf32>
    %cst_26 = arith.constant dense<0.000000e+00> : vector<8x512xf32>
    %40 = tpu.matmul %39, %37, %cst_26 {dimension_numbers = #tpu.dot_dimension_numbers<[1], [0], [0], [1], [0, 0, 1, 1], [], []>} : vector<8x8xf32>, vector<8x512xf32>, vector<8x512xf32> -> vector<8x512xf32>
    %41 = arith.addf %36, %40 : vector<8x512xf32>
    %42 = vector.extract_strided_slice %2 {offsets = [0, 84], sizes = [8, 512], strides = [1, 1]} : vector<8x640xf32> to vector<8x512xf32>
    %c8 = arith.constant 8 : index
    %c0_27 = arith.constant 0 : index
    %c0_28 = arith.constant 0 : index
    %43 = vector.load %arg2[%c8, %c0_27, %c0_28] : memref<9x8x8xf32, #tpu.memory_space<vmem>>, vector<1x8x8xf32>
    %44 = vector.shape_cast %43 : vector<1x8x8xf32> to vector<8x8xf32>
    %cst_29 = arith.constant dense<0.000000e+00> : vector<8x512xf32>
    %45 = tpu.matmul %44, %42, %cst_29 {dimension_numbers = #tpu.dot_dimension_numbers<[1], [0], [0], [1], [0, 0, 1, 1], [], []>} : vector<8x8xf32>, vector<8x512xf32>, vector<8x512xf32> -> vector<8x512xf32>
    %46 = arith.addf %41, %45 : vector<8x512xf32>
    %c0_30 = arith.constant 0 : index
    %c0_31 = arith.constant 0 : index
    %47 = vector.load %arg5[%c0_30, %c0_31] : memref<8x1xf32, #tpu.memory_space<vmem>>, vector<8x1xf32>
    %48 = vector.broadcast %47 : vector<8x1xf32> to vector<8x512xf32>
    %49 = arith.mulf %46, %48 : vector<8x512xf32>
    %c0_32 = arith.constant 0 : index
    %c0_33 = arith.constant 0 : index
    %50 = vector.load %arg6[%c0_32, %c0_33] : memref<8x1xf32, #tpu.memory_space<vmem>>, vector<8x1xf32>
    %51 = vector.broadcast %50 : vector<8x1xf32> to vector<8x512xf32>
    %52 = arith.addf %49, %51 : vector<8x512xf32>
    %cst_34 = arith.constant 0.000000e+00 : f32
    %53 = vector.broadcast %cst_34 : f32 to vector<8x512xf32>
    %54 = arith.maximumf %52, %53 : vector<8x512xf32>
    %c0_35 = arith.constant 0 : index
    %c0_36 = arith.constant 0 : index
    %55 = vector.load %arg7[%c0_35, %c0_36] : memref<8x512xf32, #tpu.memory_space<vmem>>, vector<8x512xf32>
    tpu.vector_store %arg7[%c0_35, %c0_36], %54 {strides = array<i32>} : memref<8x512xf32, #tpu.memory_space<vmem>>, vector<8x512xf32>,
    return
  }
  func.func @transform_0(%arg0: i32, %arg1: i32) -> (i32, i32, i32) {
    %c0_i32 = arith.constant 0 : i32
    %c0_i32_0 = arith.constant 0 : i32
    %c0_i32_1 = arith.constant 0 : i32
    return %c0_i32, %arg0, %c0_i32_0 : i32, i32, i32
  }
  func.func @transform_1(%arg0: i32, %arg1: i32) -> (i32, i32) {
    %c0_i32 = arith.constant 0 : i32
    %c0_i32_0 = arith.constant 0 : i32
    return %c0_i32, %arg1 : i32, i32
  }
  func.func @transform_2(%arg0: i32, %arg1: i32) -> (i32, i32) {
    %c1_i32 = arith.constant 1 : i32
    %0 = arith.addi %arg1, %c1_i32 : i32
    %c0_i32 = arith.constant 0 : i32
    %c0_i32_0 = arith.constant 0 : i32
    return %c0_i32, %0 : i32, i32
  }
  func.func @transform_3(%arg0: i32, %arg1: i32) -> (i32, i32) {
    %c0_i32 = arith.constant 0 : i32
    %c0_i32_0 = arith.constant 0 : i32
    return %arg0, %c0_i32 : i32, i32
  }
  func.func @transform_4(%arg0: i32, %arg1: i32) -> (i32, i32) {
    %c0_i32 = arith.constant 0 : i32
    %c0_i32_0 = arith.constant 0 : i32
    return %arg0, %c0_i32 : i32, i32
  }
  func.func @transform_5(%arg0: i32, %arg1: i32) -> (i32, i32) {
    %c0_i32 = arith.constant 0 : i32
    return %arg0, %arg1 : i32, i32
  }
}

module attributes {stable_mosaic.version = 11 : i64} {
  func.func @_bn_stats_kernel(%arg0: i32, %arg1: i32, %arg2: memref<9x8x8xf32, #tpu.memory_space<vmem>>, %arg3: memref<8x512xf32, #tpu.memory_space<vmem>>, %arg4: memref<8x512xf32, #tpu.memory_space<vmem>>, %arg5: memref<1x512xf32, #tpu.memory_space<vmem>>, %arg6: memref<8x1xf32, #tpu.memory_space<vmem>>, %arg7: memref<8x1xf32, #tpu.memory_space<vmem>>, %arg8: memref<8x1xf32, #tpu.memory_space<vmem>>, %arg9: memref<8x1xf32, #tpu.memory_space<vmem>>) attributes {dimension_semantics = [#tpu.dimension_semantics<parallel>, #tpu.dimension_semantics<arbitrary>], iteration_bounds = array<i64: 1, 2>, scalar_prefetch = 0 : i64, scratch_operands = 2 : i64, tpu.core_type = #tpu.core_type<tc>, window_params = [{transform_indices = @transform_0, window_bounds = array<i64: 9, 8, 8>}, {transform_indices = @transform_1, window_bounds = array<i64: 8, 512>}, {transform_indices = @transform_2, window_bounds = array<i64: 8, 512>}, {transform_indices = @transform_3, window_bounds = array<i64: 1, 512>}, {transform_indices = @transform_4, window_bounds = array<i64: 8, 1>}, {transform_indices = @transform_5, window_bounds = array<i64: 8, 1>}]} {
    %c0_i32 = arith.constant 0 : i32
    %0 = arith.cmpi eq, %arg1, %c0_i32 : i32
    %1 = arith.extui %0 : i1 to i32
    %c0_i32_0 = arith.constant 0 : i32
    %2 = arith.cmpi ne, %1, %c0_i32_0 : i32
    scf.if %2 {
      %cst_44 = arith.constant 0.000000e+00 : f32
      %67 = vector.broadcast %cst_44 : f32 to vector<8x1xf32>
      %c0_45 = arith.constant 0 : index
      %c0_46 = arith.constant 0 : index
      %68 = vector.load %arg8[%c0_45, %c0_46] : memref<8x1xf32, #tpu.memory_space<vmem>>, vector<8x1xf32>
      tpu.vector_store %arg8[%c0_45, %c0_46], %67 {strides = array<i32>} : memref<8x1xf32, #tpu.memory_space<vmem>>, vector<8x1xf32>,
      %cst_47 = arith.constant 0.000000e+00 : f32
      %69 = vector.broadcast %cst_47 : f32 to vector<8x1xf32>
      %c0_48 = arith.constant 0 : index
      %c0_49 = arith.constant 0 : index
      %70 = vector.load %arg9[%c0_48, %c0_49] : memref<8x1xf32, #tpu.memory_space<vmem>>, vector<8x1xf32>
      tpu.vector_store %arg9[%c0_48, %c0_49], %69 {strides = array<i32>} : memref<8x1xf32, #tpu.memory_space<vmem>>, vector<8x1xf32>,
    } else {
    }
    %c0 = arith.constant 0 : index
    %c0_1 = arith.constant 0 : index
    %3 = vector.load %arg3[%c0, %c0_1] : memref<8x512xf32, #tpu.memory_space<vmem>>, vector<8x512xf32>
    %c0_2 = arith.constant 0 : index
    %c0_3 = arith.constant 0 : index
    %4 = vector.load %arg4[%c0_2, %c0_3] : memref<8x512xf32, #tpu.memory_space<vmem>>, vector<8x128xf32>
    %5 = tpu.concatenate %3, %4 in 1 : vector<8x512xf32>, vector<8x128xf32> -> vector<8x640xf32>
    %6 = vector.extract_strided_slice %5 {offsets = [0, 0], sizes = [8, 512], strides = [1, 1]} : vector<8x640xf32> to vector<8x512xf32>
    %c0_4 = arith.constant 0 : index
    %c0_5 = arith.constant 0 : index
    %c0_6 = arith.constant 0 : index
    %7 = vector.load %arg2[%c0_4, %c0_5, %c0_6] : memref<9x8x8xf32, #tpu.memory_space<vmem>>, vector<1x8x8xf32>
    %8 = vector.shape_cast %7 : vector<1x8x8xf32> to vector<8x8xf32>
    %cst = arith.constant dense<0.000000e+00> : vector<8x512xf32>
    %9 = tpu.matmul %8, %6, %cst {dimension_numbers = #tpu.dot_dimension_numbers<[1], [0], [0], [1], [0, 0, 1, 1], [], []>} : vector<8x8xf32>, vector<8x512xf32>, vector<8x512xf32> -> vector<8x512xf32>
    %10 = vector.extract_strided_slice %5 {offsets = [0, 2], sizes = [8, 512], strides = [1, 1]} : vector<8x640xf32> to vector<8x512xf32>
    %c1 = arith.constant 1 : index
    %c0_7 = arith.constant 0 : index
    %c0_8 = arith.constant 0 : index
    %11 = vector.load %arg2[%c1, %c0_7, %c0_8] : memref<9x8x8xf32, #tpu.memory_space<vmem>>, vector<1x8x8xf32>
    %12 = vector.shape_cast %11 : vector<1x8x8xf32> to vector<8x8xf32>
    %cst_9 = arith.constant dense<0.000000e+00> : vector<8x512xf32>
    %13 = tpu.matmul %12, %10, %cst_9 {dimension_numbers = #tpu.dot_dimension_numbers<[1], [0], [0], [1], [0, 0, 1, 1], [], []>} : vector<8x8xf32>, vector<8x512xf32>, vector<8x512xf32> -> vector<8x512xf32>
    %14 = arith.addf %9, %13 : vector<8x512xf32>
    %15 = vector.extract_strided_slice %5 {offsets = [0, 4], sizes = [8, 512], strides = [1, 1]} : vector<8x640xf32> to vector<8x512xf32>
    %c2 = arith.constant 2 : index
    %c0_10 = arith.constant 0 : index
    %c0_11 = arith.constant 0 : index
    %16 = vector.load %arg2[%c2, %c0_10, %c0_11] : memref<9x8x8xf32, #tpu.memory_space<vmem>>, vector<1x8x8xf32>
    %17 = vector.shape_cast %16 : vector<1x8x8xf32> to vector<8x8xf32>
    %cst_12 = arith.constant dense<0.000000e+00> : vector<8x512xf32>
    %18 = tpu.matmul %17, %15, %cst_12 {dimension_numbers = #tpu.dot_dimension_numbers<[1], [0], [0], [1], [0, 0, 1, 1], [], []>} : vector<8x8xf32>, vector<8x512xf32>, vector<8x512xf32> -> vector<8x512xf32>
    %19 = arith.addf %14, %18 : vector<8x512xf32>
    %20 = vector.extract_strided_slice %5 {offsets = [0, 40], sizes = [8, 512], strides = [1, 1]} : vector<8x640xf32> to vector<8x512xf32>
    %c3 = arith.constant 3 : index
    %c0_13 = arith.constant 0 : index
    %c0_14 = arith.constant 0 : index
    %21 = vector.load %arg2[%c3, %c0_13, %c0_14] : memref<9x8x8xf32, #tpu.memory_space<vmem>>, vector<1x8x8xf32>
    %22 = vector.shape_cast %21 : vector<1x8x8xf32> to vector<8x8xf32>
    %cst_15 = arith.constant dense<0.000000e+00> : vector<8x512xf32>
    %23 = tpu.matmul %22, %20, %cst_15 {dimension_numbers = #tpu.dot_dimension_numbers<[1], [0], [0], [1], [0, 0, 1, 1], [], []>} : vector<8x8xf32>, vector<8x512xf32>, vector<8x512xf32> -> vector<8x512xf32>
    %24 = arith.addf %19, %23 : vector<8x512xf32>
    %25 = vector.extract_strided_slice %5 {offsets = [0, 42], sizes = [8, 512], strides = [1, 1]} : vector<8x640xf32> to vector<8x512xf32>
    %c4 = arith.constant 4 : index
    %c0_16 = arith.constant 0 : index
    %c0_17 = arith.constant 0 : index
    %26 = vector.load %arg2[%c4, %c0_16, %c0_17] : memref<9x8x8xf32, #tpu.memory_space<vmem>>, vector<1x8x8xf32>
    %27 = vector.shape_cast %26 : vector<1x8x8xf32> to vector<8x8xf32>
    %cst_18 = arith.constant dense<0.000000e+00> : vector<8x512xf32>
    %28 = tpu.matmul %27, %25, %cst_18 {dimension_numbers = #tpu.dot_dimension_numbers<[1], [0], [0], [1], [0, 0, 1, 1], [], []>} : vector<8x8xf32>, vector<8x512xf32>, vector<8x512xf32> -> vector<8x512xf32>
    %29 = arith.addf %24, %28 : vector<8x512xf32>
    %30 = vector.extract_strided_slice %5 {offsets = [0, 44], sizes = [8, 512], strides = [1, 1]} : vector<8x640xf32> to vector<8x512xf32>
    %c5 = arith.constant 5 : index
    %c0_19 = arith.constant 0 : index
    %c0_20 = arith.constant 0 : index
    %31 = vector.load %arg2[%c5, %c0_19, %c0_20] : memref<9x8x8xf32, #tpu.memory_space<vmem>>, vector<1x8x8xf32>
    %32 = vector.shape_cast %31 : vector<1x8x8xf32> to vector<8x8xf32>
    %cst_21 = arith.constant dense<0.000000e+00> : vector<8x512xf32>
    %33 = tpu.matmul %32, %30, %cst_21 {dimension_numbers = #tpu.dot_dimension_numbers<[1], [0], [0], [1], [0, 0, 1, 1], [], []>} : vector<8x8xf32>, vector<8x512xf32>, vector<8x512xf32> -> vector<8x512xf32>
    %34 = arith.addf %29, %33 : vector<8x512xf32>
    %35 = vector.extract_strided_slice %5 {offsets = [0, 80], sizes = [8, 512], strides = [1, 1]} : vector<8x640xf32> to vector<8x512xf32>
    %c6 = arith.constant 6 : index
    %c0_22 = arith.constant 0 : index
    %c0_23 = arith.constant 0 : index
    %36 = vector.load %arg2[%c6, %c0_22, %c0_23] : memref<9x8x8xf32, #tpu.memory_space<vmem>>, vector<1x8x8xf32>
    %37 = vector.shape_cast %36 : vector<1x8x8xf32> to vector<8x8xf32>
    %cst_24 = arith.constant dense<0.000000e+00> : vector<8x512xf32>
    %38 = tpu.matmul %37, %35, %cst_24 {dimension_numbers = #tpu.dot_dimension_numbers<[1], [0], [0], [1], [0, 0, 1, 1], [], []>} : vector<8x8xf32>, vector<8x512xf32>, vector<8x512xf32> -> vector<8x512xf32>
    %39 = arith.addf %34, %38 : vector<8x512xf32>
    %40 = vector.extract_strided_slice %5 {offsets = [0, 82], sizes = [8, 512], strides = [1, 1]} : vector<8x640xf32> to vector<8x512xf32>
    %c7 = arith.constant 7 : index
    %c0_25 = arith.constant 0 : index
    %c0_26 = arith.constant 0 : index
    %41 = vector.load %arg2[%c7, %c0_25, %c0_26] : memref<9x8x8xf32, #tpu.memory_space<vmem>>, vector<1x8x8xf32>
    %42 = vector.shape_cast %41 : vector<1x8x8xf32> to vector<8x8xf32>
    %cst_27 = arith.constant dense<0.000000e+00> : vector<8x512xf32>
    %43 = tpu.matmul %42, %40, %cst_27 {dimension_numbers = #tpu.dot_dimension_numbers<[1], [0], [0], [1], [0, 0, 1, 1], [], []>} : vector<8x8xf32>, vector<8x512xf32>, vector<8x512xf32> -> vector<8x512xf32>
    %44 = arith.addf %39, %43 : vector<8x512xf32>
    %45 = vector.extract_strided_slice %5 {offsets = [0, 84], sizes = [8, 512], strides = [1, 1]} : vector<8x640xf32> to vector<8x512xf32>
    %c8 = arith.constant 8 : index
    %c0_28 = arith.constant 0 : index
    %c0_29 = arith.constant 0 : index
    %46 = vector.load %arg2[%c8, %c0_28, %c0_29] : memref<9x8x8xf32, #tpu.memory_space<vmem>>, vector<1x8x8xf32>
    %47 = vector.shape_cast %46 : vector<1x8x8xf32> to vector<8x8xf32>
    %cst_30 = arith.constant dense<0.000000e+00> : vector<8x512xf32>
    %48 = tpu.matmul %47, %45, %cst_30 {dimension_numbers = #tpu.dot_dimension_numbers<[1], [0], [0], [1], [0, 0, 1, 1], [], []>} : vector<8x8xf32>, vector<8x512xf32>, vector<8x512xf32> -> vector<8x512xf32>
    %49 = arith.addf %44, %48 : vector<8x512xf32>
    %c0_31 = arith.constant 0 : index
    %c0_32 = arith.constant 0 : index
    %50 = vector.load %arg5[%c0_31, %c0_32] : memref<1x512xf32, #tpu.memory_space<vmem>>, vector<1x512xf32>
    %51 = vector.broadcast %50 : vector<1x512xf32> to vector<8x512xf32>
    %52 = arith.mulf %49, %51 : vector<8x512xf32>
    %c0_33 = arith.constant 0 : index
    %c0_34 = arith.constant 0 : index
    %53 = vector.load %arg8[%c0_33, %c0_34] : memref<8x1xf32, #tpu.memory_space<vmem>>, vector<8x1xf32>
    %cst_35 = arith.constant dense<0.000000e+00> : vector<8xf32>
    %54 = vector.multi_reduction <add>, %52, %cst_35 [1] : vector<8x512xf32> to vector<8xf32>
    %55 = vector.shape_cast %54 : vector<8xf32> to vector<8x1xf32>
    %56 = arith.addf %53, %55 : vector<8x1xf32>
    %c0_36 = arith.constant 0 : index
    %c0_37 = arith.constant 0 : index
    %57 = vector.load %arg8[%c0_36, %c0_37] : memref<8x1xf32, #tpu.memory_space<vmem>>, vector<8x1xf32>
    tpu.vector_store %arg8[%c0_36, %c0_37], %56 {strides = array<i32>} : memref<8x1xf32, #tpu.memory_space<vmem>>, vector<8x1xf32>,
    %c0_38 = arith.constant 0 : index
    %c0_39 = arith.constant 0 : index
    %58 = vector.load %arg9[%c0_38, %c0_39] : memref<8x1xf32, #tpu.memory_space<vmem>>, vector<8x1xf32>
    %59 = arith.mulf %52, %49 : vector<8x512xf32>
    %cst_40 = arith.constant dense<0.000000e+00> : vector<8xf32>
    %60 = vector.multi_reduction <add>, %59, %cst_40 [1] : vector<8x512xf32> to vector<8xf32>
    %61 = vector.shape_cast %60 : vector<8xf32> to vector<8x1xf32>
    %62 = arith.addf %58, %61 : vector<8x1xf32>
    %c0_41 = arith.constant 0 : index
    %c0_42 = arith.constant 0 : index
    %63 = vector.load %arg9[%c0_41, %c0_42] : memref<8x1xf32, #tpu.memory_space<vmem>>, vector<8x1xf32>
    tpu.vector_store %arg9[%c0_41, %c0_42], %62 {strides = array<i32>} : memref<8x1xf32, #tpu.memory_space<vmem>>, vector<8x1xf32>,
    %c1_i32 = arith.constant 1 : i32
    %64 = arith.cmpi eq, %arg1, %c1_i32 : i32
    %65 = arith.extui %64 : i1 to i32
    %c0_i32_43 = arith.constant 0 : i32
    %66 = arith.cmpi ne, %65, %c0_i32_43 : i32
    scf.if %66 {
      %c0_44 = arith.constant 0 : index
      %c0_45 = arith.constant 0 : index
      %67 = vector.load %arg8[%c0_44, %c0_45] : memref<8x1xf32, #tpu.memory_space<vmem>>, vector<8x1xf32>
      %cst_46 = arith.constant 0.001953125 : f32
      %68 = vector.broadcast %cst_46 : f32 to vector<8x1xf32>
      %69 = arith.mulf %67, %68 : vector<8x1xf32>
      %c0_47 = arith.constant 0 : index
      %c0_48 = arith.constant 0 : index
      %70 = vector.load %arg9[%c0_47, %c0_48] : memref<8x1xf32, #tpu.memory_space<vmem>>, vector<8x1xf32>
      %cst_49 = arith.constant 0.001953125 : f32
      %71 = vector.broadcast %cst_49 : f32 to vector<8x1xf32>
      %72 = arith.mulf %70, %71 : vector<8x1xf32>
      %73 = arith.mulf %69, %69 : vector<8x1xf32>
      %74 = arith.subf %72, %73 : vector<8x1xf32>
      %cst_50 = arith.constant 0.000000e+00 : f32
      %75 = vector.broadcast %cst_50 : f32 to vector<8x1xf32>
      %76 = arith.maximumf %74, %75 : vector<8x1xf32>
      %cst_51 = arith.constant 9.99999974E-6 : f32
      %77 = vector.broadcast %cst_51 : f32 to vector<8x1xf32>
      %78 = arith.addf %76, %77 : vector<8x1xf32>
      %79 = math.rsqrt %78 : vector<8x1xf32>
      %c0_52 = arith.constant 0 : index
      %c0_53 = arith.constant 0 : index
      %80 = vector.load %arg6[%c0_52, %c0_53] : memref<8x1xf32, #tpu.memory_space<vmem>>, vector<8x1xf32>
      tpu.vector_store %arg6[%c0_52, %c0_53], %79 {strides = array<i32>} : memref<8x1xf32, #tpu.memory_space<vmem>>, vector<8x1xf32>,
      %cst_54 = arith.constant 0.000000e+00 : f32
      %81 = vector.broadcast %cst_54 : f32 to vector<8x1xf32>
      %82 = arith.subf %81, %69 : vector<8x1xf32>
      %83 = arith.mulf %82, %79 : vector<8x1xf32>
      %c0_55 = arith.constant 0 : index
      %c0_56 = arith.constant 0 : index
      %84 = vector.load %arg7[%c0_55, %c0_56] : memref<8x1xf32, #tpu.memory_space<vmem>>, vector<8x1xf32>
      tpu.vector_store %arg7[%c0_55, %c0_56], %83 {strides = array<i32>} : memref<8x1xf32, #tpu.memory_space<vmem>>, vector<8x1xf32>,
    } else {
    }
    return
  }
  func.func @transform_0(%arg0: i32, %arg1: i32) -> (i32, i32, i32) {
    %c0_i32 = arith.constant 0 : i32
    %c0_i32_0 = arith.constant 0 : i32
    %c0_i32_1 = arith.constant 0 : i32
    return %c0_i32, %arg0, %c0_i32_0 : i32, i32, i32
  }
  func.func @transform_1(%arg0: i32, %arg1: i32) -> (i32, i32) {
    %c0_i32 = arith.constant 0 : i32
    %c0_i32_0 = arith.constant 0 : i32
    return %c0_i32, %arg1 : i32, i32
  }
  func.func @transform_2(%arg0: i32, %arg1: i32) -> (i32, i32) {
    %c1_i32 = arith.constant 1 : i32
    %0 = arith.addi %arg1, %c1_i32 : i32
    %c0_i32 = arith.constant 0 : i32
    %c0_i32_0 = arith.constant 0 : i32
    return %c0_i32, %0 : i32, i32
  }
  func.func @transform_3(%arg0: i32, %arg1: i32) -> (i32, i32) {
    %c0_i32 = arith.constant 0 : i32
    %c0_i32_0 = arith.constant 0 : i32
    return %c0_i32, %arg1 : i32, i32
  }
  func.func @transform_4(%arg0: i32, %arg1: i32) -> (i32, i32) {
    %c0_i32 = arith.constant 0 : i32
    %c0_i32_0 = arith.constant 0 : i32
    return %arg0, %c0_i32 : i32, i32
  }
  func.func @transform_5(%arg0: i32, %arg1: i32) -> (i32, i32) {
    %c0_i32 = arith.constant 0 : i32
    %c0_i32_0 = arith.constant 0 : i32
    return %arg0, %c0_i32 : i32, i32
  }
}

</mosaic_0001>

<llo_original>
// kernel: atr_conv.2
$region0: #{atr_conv.2}
  #allocation0 [shape = 'u32[]', space=smem, size = 0x4, offset = 0x4, fixed_abs, tag = 'smem constant byte address 0x4 - core index']
  #allocation1 [shape = 'u32[72,128]{1,0:T(1,128)}', space=vmem, size = 0x9000, scoped, tag = 'internal scratch']
  #allocation2 [shape = 'f32[8,1]{1,0:T(8,128)}', space=vmem, size = 0x1000, scoped, tag = 'scratch operand']
  #allocation3 [shape = 'f32[8,1]{1,0:T(8,128)}', space=vmem, size = 0x1000, scoped, tag = 'scratch operand']
  %s0 = inlined_call_operand.vmem [shape: f32[9,8,8], index: 0, kind: input, shape index: {}]
  %s1 = inlined_call_operand.vmem [shape: f32[8,1536], index: 1, kind: input, shape index: {}, may-alias: {1,2}]
  %s2 = inlined_call_operand.vmem [shape: f32[8,1536], index: 2, kind: input, shape index: {}, may-alias: {1,2}]
  %s3 = inlined_call_operand.vmem [shape: f32[1,1024], index: 3, kind: input, shape index: {}]
  %s4 = inlined_call_operand.vmem [shape: f32[8,1], index: 4, kind: output, shape index: {0}]
  %s5 = inlined_call_operand.vmem [shape: f32[8,1], index: 5, kind: output, shape index: {1}]
  %6 = xla_tuple %s4, %s5
  %s7 = sld [smem:[#allocation0]]
  $region65: #{atr_conv.2} parent=0
    _
  %s9 = ssub.s32 1, %s7
  %s10 = scalar_select 0, %s9, %s7
  loop: start=0, step=1, limit=4
  $region2: #{atr_conv.2} parent=0 // loop_pre_header
    _
  $region3: #{atr_conv.2} parent=0 // loop_header
    %s12 = sphi 0, %s16
    %p13 = scmp.ge.s32.totalorder %s12, 4
    %s19 = sphi 0, %s31
    %s20 = sphi 0, %s27
    %s21 = sphi 0, %s19
    %s22 = sphi 0, %s20
    %s23 = sphi 0, %s21
    %s24 = sphi 0, %s22
    %s34 = sphi 0, %s36
    %s37 = sphi 0, %s34
    %s38 = sphi 0, %s37
    %s54 = sphi 0, %s38
    %s60 = sphi 0, %s62
    %s63 = sphi 0, %s60
    %s64 = sphi 0, %s63
    %s80 = sphi 0, %s64
    %s88 = sphi 0, %s90
    %s91 = sphi 0, %s88
    %s92 = sphi 0, %s91
    %s108 = sphi 0, %s92
    %s114 = sphi 0, %s116
    %s117 = sphi 0, %s114
    %s118 = sphi 0, %s117
    %s134 = sphi 0, %s118
    %s140 = sphi 0, %s142
    %s143 = sphi 0, %s140
    %s144 = sphi 0, %s143
    %s160 = sphi 0, %s144
    %s166 = sphi 0, %s168
    %s169 = sphi 0, %s166
    %s170 = sphi 0, %s169
    %s186 = sphi 0, %s170
  $region4: #{atr_conv.2} parent=0 // loop_header_branch
    %15 = sbr.rel (%p13) target = $region8
  $region5: #{atr_conv.2} parent=0 // loop_body
    %s17 = ssub.s32 %s12, 1
    %s18 = ssub.s32 %s12, 2
    %s25 = sadd.s32 1, %s20
    %p26 = scmp.ge.s32.totalorder %s25, 2
    %s27 = scalar_select %p26, 0, %s25
    %s28 = sadd.s32 1, %s19
    %s29 = scalar_select %p26, %s28, %s19
    %p30 = scmp.ge.s32.totalorder %s29, 1
    %s31 = scalar_select %p30, 0, %s29
    %s32 = ssub.s32 %s19, %s31
    %p33 = scmp.eq.s32.totalorder %s32, 0
    %s35 = sadd.s32 %s34, 1
    %s36 = scalar_select %p33, %s34, %s35
    %p39 = pneg %p33
    %p40 = scmp.eq.s32.totalorder %s12, 1
    %p41 = por %p39, %p40
    %p42 = scmp.ne.s32.totalorder %s34, %s37
    %p43 = scmp.eq.s32.totalorder %s12, 0
    %p44 = por %p42, %p43
    %p45 = scmp.ne.s32.totalorder %s34, %s37
    %p46 = scmp.eq.s32.totalorder %s17, 1
    %p47 = por %p45, %p46
    %p48 = scmp.ne.s32.totalorder %s37, %s38
    %p49 = scmp.eq.s32.totalorder %s17, 0
    %p50 = por %p48, %p49
    %p51 = scmp.ne.s32.totalorder %s37, %s38
    %p52 = scmp.eq.s32.totalorder %s18, 1
    %p53 = por %p51, %p52
    %p55 = scmp.ne.s32.totalorder %s38, %s54
    %p56 = scmp.eq.s32.totalorder %s18, 0
    %p57 = por %p55, %p56
    %s58 = ssub.s32 %s20, %s27
    %p59 = scmp.eq.s32.totalorder %s58, 0
    %s61 = sadd.s32 %s60, 1
    %s62 = scalar_select %p59, %s60, %s61
    %p65 = pneg %p59
    %p66 = scmp.eq.s32.totalorder %s12, 1
    %p67 = por %p65, %p66
    %p68 = scmp.ne.s32.totalorder %s60, %s63
    %p69 = scmp.eq.s32.totalorder %s12, 0
    %p70 = por %p68, %p69
    %p71 = scmp.ne.s32.totalorder %s60, %s63
    %p72 = scmp.eq.s32.totalorder %s17, 1
    %p73 = por %p71, %p72
    %p74 = scmp.ne.s32.totalorder %s63, %s64
    %p75 = scmp.eq.s32.totalorder %s17, 0
    %p76 = por %p74, %p75
    %p77 = scmp.ne.s32.totalorder %s63, %s64
    %p78 = scmp.eq.s32.totalorder %s18, 1
    %p79 = por %p77, %p78
    %p81 = scmp.ne.s32.totalorder %s64, %s80
    %p82 = scmp.eq.s32.totalorder %s18, 0
    %p83 = por %p81, %p82
    %s84 = sadd.s32 %s20, 1
    %s85 = sadd.s32 %s27, 1
    %s86 = ssub.s32 %s84, %s85
    %p87 = scmp.eq.s32.totalorder %s86, 0
    %s89 = sadd.s32 %s88, 1
    %s90 = scalar_select %p87, %s88, %s89
    %p93 = pneg %p87
    %p94 = scmp.eq.s32.totalorder %s12, 1
    %p95 = por %p93, %p94
    %p96 = scmp.ne.s32.totalorder %s88, %s91
    %p97 = scmp.eq.s32.totalorder %s12, 0
    %p98 = por %p96, %p97
    %p99 = scmp.ne.s32.totalorder %s88, %s91
    %p100 = scmp.eq.s32.totalorder %s17, 1
    %p101 = por %p99, %p100
    %p102 = scmp.ne.s32.totalorder %s91, %s92
    %p103 = scmp.eq.s32.totalorder %s17, 0
    %p104 = por %p102, %p103
    %p105 = scmp.ne.s32.totalorder %s91, %s92
    %p106 = scmp.eq.s32.totalorder %s18, 1
    %p107 = por %p105, %p106
    %p109 = scmp.ne.s32.totalorder %s92, %s108
    %p110 = scmp.eq.s32.totalorder %s18, 0
    %p111 = por %p109, %p110
    %s112 = ssub.s32 %s20, %s27
    %p113 = scmp.eq.s32.totalorder %s112, 0
    %s115 = sadd.s32 %s114, 1
    %s116 = scalar_select %p113, %s114, %s115
    %p119 = pneg %p113
    %p120 = scmp.eq.s32.totalorder %s12, 1
    %p121 = por %p119, %p120
    %p122 = scmp.ne.s32.totalorder %s114, %s117
    %p123 = scmp.eq.s32.totalorder %s12, 0
    %p124 = por %p122, %p123
    %p125 = scmp.ne.s32.totalorder %s114, %s117
    %p126 = scmp.eq.s32.totalorder %s17, 1
    %p127 = por %p125, %p126
    %p128 = scmp.ne.s32.totalorder %s117, %s118
    %p129 = scmp.eq.s32.totalorder %s17, 0
    %p130 = por %p128, %p129
    %p131 = scmp.ne.s32.totalorder %s117, %s118
    %p132 = scmp.eq.s32.totalorder %s18, 1
    %p133 = por %p131, %p132
    %p135 = scmp.ne.s32.totalorder %s118, %s134
    %p136 = scmp.eq.s32.totalorder %s18, 0
    %p137 = por %p135, %p136
    %s138 = ssub.s32 %s19, %s31
    %p139 = scmp.eq.s32.totalorder %s138, 0
    %s141 = sadd.s32 %s140, 1
    %s142 = scalar_select %p139, %s140, %s141
    %p145 = pneg %p139
    %p146 = scmp.eq.s32.totalorder %s12, 1
    %p147 = por %p145, %p146
    %p148 = scmp.ne.s32.totalorder %s140, %s143
    %p149 = scmp.eq.s32.totalorder %s12, 0
    %p150 = por %p148, %p149
    %p151 = scmp.ne.s32.totalorder %s140, %s143
    %p152 = scmp.eq.s32.totalorder %s17, 1
    %p153 = por %p151, %p152
    %p154 = scmp.ne.s32.totalorder %s143, %s144
    %p155 = scmp.eq.s32.totalorder %s17, 0
    %p156 = por %p154, %p155
    %p157 = scmp.ne.s32.totalorder %s143, %s144
    %p158 = scmp.eq.s32.totalorder %s18, 1
    %p159 = por %p157, %p158
    %p161 = scmp.ne.s32.totalorder %s144, %s160
    %p162 = scmp.eq.s32.totalorder %s18, 0
    %p163 = por %p161, %p162
    %s164 = ssub.s32 %s19, %s31
    %p165 = scmp.eq.s32.totalorder %s164, 0
    %s167 = sadd.s32 %s166, 1
    %s168 = scalar_select %p165, %s166, %s167
    %p171 = pneg %p165
    %p172 = scmp.eq.s32.totalorder %s12, 1
    %p173 = por %p171, %p172
    %p174 = scmp.ne.s32.totalorder %s166, %s169
    %p175 = scmp.eq.s32.totalorder %s12, 0
    %p176 = por %p174, %p175
    %p177 = scmp.ne.s32.totalorder %s166, %s169
    %p178 = scmp.eq.s32.totalorder %s17, 1
    %p179 = por %p177, %p178
    %p180 = scmp.ne.s32.totalorder %s169, %s170
    %p181 = scmp.eq.s32.totalorder %s17, 0
    %p182 = por %p180, %p181
    %p183 = scmp.ne.s32.totalorder %s169, %s170
    %p184 = scmp.eq.s32.totalorder %s18, 1
    %p185 = por %p183, %p184
    %p187 = scmp.ne.s32.totalorder %s170, %s186
    %p188 = scmp.eq.s32.totalorder %s18, 0
    %p189 = por %p187, %p188
    %p190 = scmp.le.s32.totalorder 1, %s12
    %p191 = scmp.lt.s32.totalorder %s12, 3
    %p192 = pnand %p190, %p191
    %p193 = pneg %p192
    // Predicated region
    $region9: #{atr_conv.2} parent=5 // pred_check
      _
    $region10: #{atr_conv.2} parent=5 // pred_check_branch
      %195 = sbr.rel (%p192) target = $region12
    $region11: #{atr_conv.2} parent=5 // pred_region
      %s196 = ssub.s32 %s12, 1
      // Predicated region
      $region13: #{atr_conv.2} parent=11 // pred_check
        %p197 = pneg %p50
      $region14: #{atr_conv.2} parent=11 // pred_check_branch
        %199 = sbr.rel (%p197) target = $region16
      $region15: #{atr_conv.2} parent=11 // pred_region
        %p200 = scmp.lt.s32.totalorder %s21, 0
        %s201 = scalar_select %p200, %s21, 0
        %s202 = smul.addr %s201, 8
        %s203 = scalar_lea.vmem %s0, %s202
      $region16: #{atr_conv.2} parent=11 // pred_fallthru
        _
    $region12: #{atr_conv.2} parent=5 // pred_fallthru
      _
    %p204 = scmp.lt.s32.totalorder %s12, 2
    // Predicated region
    $region17: #{atr_conv.2} parent=5 // pred_check
      %p205 = pneg %p204
    $region18: #{atr_conv.2} parent=5 // pred_check_branch
      %207 = sbr.rel (%p205) target = $region20
    $region19: #{atr_conv.2} parent=5 // pred_region
      // Predicated region
      $region21: #{atr_conv.2} parent=19 // pred_check
        %p208 = pneg %p70
      $region22: #{atr_conv.2} parent=19 // pred_check_branch
        %210 = sbr.rel (%p208) target = $region24
      $region23: #{atr_conv.2} parent=19 // pred_region
        %s211 = smul.u32 4, %s20
        %p212 = scmp.lt.s32.totalorder %s211, 11
        %s213 = scalar_select %p212, %s211, 11
        %s214 = smul.addr %s213, 8
        %s215 = scalar_lea.vmem %s1, %s214
        %s216 = smul.u32 4, %s20
      $region24: #{atr_conv.2} parent=19 // pred_fallthru
        _
      // Predicated region
      $region25: #{atr_conv.2} parent=19 // pred_check
        %p217 = pneg %p98
      $region26: #{atr_conv.2} parent=19 // pred_check_branch
        %219 = sbr.rel (%p217) target = $region28
      $region27: #{atr_conv.2} parent=19 // pred_region
        %s220 = sadd.s32 %s20, 1
        %s221 = smul.u32 4, %s220
        %p222 = scmp.lt.s32.totalorder %s221, 11
        %s223 = scalar_select %p222, %s221, 11
        %s224 = smul.addr %s223, 8
        %s225 = scalar_lea.vmem %s2, %s224
        %s226 = sadd.s32 %s20, 1
        %s227 = smul.u32 4, %s226
      $region28: #{atr_conv.2} parent=19 // pred_fallthru
        _
      // Predicated region
      $region29: #{atr_conv.2} parent=19 // pred_check
        %p228 = pneg %p124
      $region30: #{atr_conv.2} parent=19 // pred_check_branch
        %230 = sbr.rel (%p228) target = $region32
      $region31: #{atr_conv.2} parent=19 // pred_region
        %s231 = smul.u32 4, %s20
        %p232 = scmp.lt.s32.totalorder %s231, 7
        %s233 = scalar_select %p232, %s231, 7
        %s234 = scalar_lea.vmem %s3, %s233
        %s235 = smul.u32 4, %s20
      $region32: #{atr_conv.2} parent=19 // pred_fallthru
        _
    $region20: #{atr_conv.2} parent=5 // pred_fallthru
      _
    %p236 = scmp.le.s32.totalorder 1, %s12
    %p237 = scmp.lt.s32.totalorder %s12, 3
    %p238 = pnand %p236, %p237
    %p239 = pneg %p238
    // Predicated region
    $region33: #{atr_conv.2} parent=5 // pred_check
      _
    $region34: #{atr_conv.2} parent=5 // pred_check_branch
      %241 = sbr.rel (%p238) target = $region36
    $region35: #{atr_conv.2} parent=5 // pred_region
      %s242 = ssub.s32 %s12, 1
      %p243 = scmp.lt.s32.totalorder %s21, 0
      %s244 = scalar_select %p243, %s21, 0
      %s245 = smul.addr %s244, 8
      %s246 = scalar_lea.vmem %s0, %s245
      %p247 = pneg %p50
      %p248 = pneg %p47
      %s249 = smul.u32 4, %s22
      %p250 = scmp.lt.s32.totalorder %s249, 11
      %s251 = scalar_select %p250, %s249, 11
      %s252 = smul.addr %s251, 8
      %s253 = scalar_lea.vmem %s1, %s252
      %p254 = pneg %p76
      %p255 = pneg %p73
      %s256 = sadd.s32 %s22, 1
      %s257 = smul.u32 4, %s256
      %p258 = scmp.lt.s32.totalorder %s257, 11
      %s259 = scalar_select %p258, %s257, 11
      %s260 = smul.addr %s259, 8
      %s261 = scalar_lea.vmem %s2, %s260
      %p262 = pneg %p104
      %p263 = pneg %p101
      %s264 = smul.u32 4, %s22
      %p265 = scmp.lt.s32.totalorder %s264, 7
      %s266 = scalar_select %p265, %s264, 7
      %s267 = scalar_lea.vmem %s3, %s266
      %p268 = pneg %p130
      %p269 = pneg %p127
      %p270 = pneg %p156
      %p271 = pneg %p153
      %p272 = scmp.lt.s32.totalorder %s21, 0
      %s273 = scalar_select %p272, %s21, 0
      %s274 = smul.addr %s273, 8
      %s275 = scalar_lea.vmem %s4, %s274
      %p276 = pneg %p182
      %p277 = pneg %p179
      %p278 = scmp.lt.s32.totalorder %s21, 0
      %s279 = scalar_select %p278, %s21, 0
      %s280 = smul.addr %s279, 8
      %s281 = scalar_lea.vmem %s5, %s280
      %p282 = scmp.lt.s32.totalorder %s21, 0
      %s283 = scalar_select %p282, %s21, 0
      %s284 = smul.addr %s283, 8
      %s285 = scalar_lea.vmem %s0, %s284
      %s286 = smul.u32 4, %s22
      %p287 = scmp.lt.s32.totalorder %s286, 11
      %s288 = scalar_select %p287, %s286, 11
      %s289 = smul.addr %s288, 8
      %s290 = scalar_lea.vmem %s1, %s289
      %s291 = smul.u32 4, %s22
      %s292 = sadd.s32 %s22, 1
      %s293 = smul.u32 4, %s292
      %p294 = scmp.lt.s32.totalorder %s293, 11
      %s295 = scalar_select %p294, %s293, 11
      %s296 = smul.addr %s295, 8
      %s297 = scalar_lea.vmem %s2, %s296
      %s298 = sadd.s32 %s22, 1
      %s299 = smul.u32 4, %s298
      %s300 = smul.u32 4, %s22
      %p301 = scmp.lt.s32.totalorder %s300, 7
      %s302 = scalar_select %p301, %s300, 7
      %s303 = scalar_lea.vmem %s3, %s302
      %s304 = smul.u32 4, %s22
      %p305 = scmp.lt.s32.totalorder %s21, 0
      %s306 = scalar_select %p305, %s21, 0
      %s307 = smul.addr %s306, 8
      %s308 = scalar_lea.vmem %s4, %s307
      %p309 = scmp.lt.s32.totalorder %s21, 0
      %s310 = scalar_select %p309, %s21, 0
      %s311 = smul.addr %s310, 8
      %s312 = scalar_lea.vmem %s5, %s311
      %p313 = scmp.eq.s32.totalorder %s22, 0
      // Predicated region
      $region37: #{atr_conv.2} parent=35 // pred_check
        %p314 = pneg %p313
      $region38: #{atr_conv.2} parent=35 // pred_check_branch
        %316 = sbr.rel (%p314) target = $region40
      $region39: #{atr_conv.2} parent=35 // pred_region
        %vm317 = vcmask 7168
        %318 = vst.msk [vmem:[#allocation2] sm:$0xff] %vm317, 0.0
        %319 = vst.msk [vmem:[#allocation3] sm:$0xff] %vm317, 0.0
      $region40: #{atr_conv.2} parent=35 // pred_fallthru
        _
      %v320 = vld [vmem:[%s290] sm:$0xff]
      %v321 = vld [vmem:[%s290 + $0x8] sm:$0xff]
      %v322 = vld [vmem:[%s290 + $0x10] sm:$0xff]
      %v323 = vld [vmem:[%s290 + $0x18] sm:$0xff]
      %v324 = vld [vmem:[%s297] sm:$0xff]
      %v325 = vld [vmem:[%s285] sm:$0xff]
      %s326 = scalar_lea.vmem %s285, 8
      %v327 = vld [vmem:[%s326] sm:$0xff]
      %333 = vrot.lane.b32.xlu0 %v320, 126
      %v334 = vpop.permute.xlu0 %333
      %335 = vrot.lane.b32.xlu0 %v321, 126
      %v336 = vpop.permute.xlu0 %335
      %337 = vrot.lane.b32.xlu0 %v322, 126
      %v338 = vpop.permute.xlu0 %337
      %339 = vrot.lane.b32.xlu0 %v323, 126
      %v340 = vpop.permute.xlu0 %339
      %341 = vrot.lane.b32.xlu0 %v324, 126
      %v342 = vpop.permute.xlu0 %341
      %vm343 = vcmask 1031168
      %v344 = vsel %vm343, %v334, %v336
      %v345 = vsel %vm343, %v336, %v338
      %v346 = vsel %vm343, %v338, %v340
      %v347 = vsel %vm343, %v340, %v342
      %vm352 = vcmask 64512
      %v354 = vsel %vm352, %v327, 0
      %356 = vmatpush.msra.mxu0 0.0
      %357 = vmatpush.msra.mxu0 0.0
      %358 = vmatpush.msra.mxu0 0.0
      %359 = vmatpush.msra.mxu0 0.0
      %360 = vmatpush.msra.mxu0 0.0
      %361 = vmatpush.msra.mxu0 0.0
      %362 = vmatpush.msra.mxu0 0.0
      %363 = vmatpush.msra.mxu0 0.0
      %364 = vmatpush.msra.mxu0 0.0
      %365 = vmatpush.msra.mxu0 0.0
      %366 = vmatpush.msra.mxu0 0.0
      %367 = vmatpush.msra.mxu0 0.0
      %368 = vmatpush.msra.mxu0 0.0
      %369 = vmatpush.msra.mxu0 0.0
      %370 = vmatpush.msra.mxu0 0.0
      %371 = vmatpush.msra.mxu0 %v344
      %372 = vmatmul.f32.gmra.mxu0 %v354
      %v373 = vpop.f32.mrf.mxu0
      %v374 = vadd.f32 0.0, %v373
      %375 = vdwg.mxu0
      %376 = vmatpush.msra.mxu0 0.0
      %377 = vmatpush.msra.mxu0 0.0
      %378 = vmatpush.msra.mxu0 0.0
      %379 = vmatpush.msra.mxu0 0.0
      %380 = vmatpush.msra.mxu0 0.0
      %381 = vmatpush.msra.mxu0 0.0
      %382 = vmatpush.msra.mxu0 0.0
      %383 = vmatpush.msra.mxu0 0.0
      %384 = vmatpush.msra.mxu0 0.0
      %385 = vmatpush.msra.mxu0 0.0
      %386 = vmatpush.msra.mxu0 0.0
      %387 = vmatpush.msra.mxu0 0.0
      %388 = vmatpush.msra.mxu0 0.0
      %389 = vmatpush.msra.mxu0 0.0
      %390 = vmatpush.msra.mxu0 0.0
      %391 = vmatpush.msra.mxu0 %v345
      %392 = vmatmul.f32.gmra.mxu0 %v354
      %v393 = vpop.f32.mrf.mxu0
      %v394 = vadd.f32 0.0, %v393
      %395 = vdwg.mxu0
      %396 = vmatpush.msra.mxu0 0.0
      %397 = vmatpush.msra.mxu0 0.0
      %398 = vmatpush.msra.mxu0 0.0
      %399 = vmatpush.msra.mxu0 0.0
      %400 = vmatpush.msra.mxu0 0.0
      %401 = vmatpush.msra.mxu0 0.0
      %402 = vmatpush.msra.mxu0 0.0
      %403 = vmatpush.msra.mxu0 0.0
      %404 = vmatpush.msra.mxu0 0.0
      %405 = vmatpush.msra.mxu0 0.0
      %406 = vmatpush.msra.mxu0 0.0
      %407 = vmatpush.msra.mxu0 0.0
      %408 = vmatpush.msra.mxu0 0.0
      %409 = vmatpush.msra.mxu0 0.0
      %410 = vmatpush.msra.mxu0 0.0
      %411 = vmatpush.msra.mxu0 %v346
      %412 = vmatmul.f32.gmra.mxu0 %v354
      %v413 = vpop.f32.mrf.mxu0
      %v414 = vadd.f32 0.0, %v413
      %415 = vdwg.mxu0
      %416 = vmatpush.msra.mxu0 0.0
      %417 = vmatpush.msra.mxu0 0.0
      %418 = vmatpush.msra.mxu0 0.0
      %419 = vmatpush.msra.mxu0 0.0
      %420 = vmatpush.msra.mxu0 0.0
      %421 = vmatpush.msra.mxu0 0.0
      %422 = vmatpush.msra.mxu0 0.0
      %423 = vmatpush.msra.mxu0 0.0
      %424 = vmatpush.msra.mxu0 0.0
      %425 = vmatpush.msra.mxu0 0.0
      %426 = vmatpush.msra.mxu0 0.0
      %427 = vmatpush.msra.mxu0 0.0
      %428 = vmatpush.msra.mxu0 0.0
      %429 = vmatpush.msra.mxu0 0.0
      %430 = vmatpush.msra.mxu0 0.0
      %431 = vmatpush.msra.mxu0 %v347
      %432 = vmatmul.f32.gmra.mxu0 %v354
      %v433 = vpop.f32.mrf.mxu0
      %v434 = vadd.f32 0.0, %v433
      %435 = vdwg.mxu0
      %v437 = vsel %vm352, %v325, 0
      %439 = vmatpush.msra.mxu0 0.0
      %440 = vmatpush.msra.mxu0 0.0
      %441 = vmatpush.msra.mxu0 0.0
      %442 = vmatpush.msra.mxu0 0.0
      %443 = vmatpush.msra.mxu0 0.0
      %444 = vmatpush.msra.mxu0 0.0
      %445 = vmatpush.msra.mxu0 0.0
      %446 = vmatpush.msra.mxu0 0.0
      %447 = vmatpush.msra.mxu0 0.0
      %448 = vmatpush.msra.mxu0 0.0
      %449 = vmatpush.msra.mxu0 0.0
      %450 = vmatpush.msra.mxu0 0.0
      %451 = vmatpush.msra.mxu0 0.0
      %452 = vmatpush.msra.mxu0 0.0
      %453 = vmatpush.msra.mxu0 0.0
      %454 = vmatpush.msra.mxu0 %v320
      %455 = vmatmul.f32.gmra.mxu0 %v437
      %v456 = vpop.f32.mrf.mxu0
      %v457 = vadd.f32 %v374, %v456
      %458 = vdwg.mxu0
      %459 = vmatpush.msra.mxu0 0.0
      %460 = vmatpush.msra.mxu0 0.0
      %461 = vmatpush.msra.mxu0 0.0
      %462 = vmatpush.msra.mxu0 0.0
      %463 = vmatpush.msra.mxu0 0.0
      %464 = vmatpush.msra.mxu0 0.0
      %465 = vmatpush.msra.mxu0 0.0
      %466 = vmatpush.msra.mxu0 0.0
      %467 = vmatpush.msra.mxu0 0.0
      %468 = vmatpush.msra.mxu0 0.0
      %469 = vmatpush.msra.mxu0 0.0
      %470 = vmatpush.msra.mxu0 0.0
      %471 = vmatpush.msra.mxu0 0.0
      %472 = vmatpush.msra.mxu0 0.0
      %473 = vmatpush.msra.mxu0 0.0
      %474 = vmatpush.msra.mxu0 %v321
      %475 = vmatmul.f32.gmra.mxu0 %v437
      %v476 = vpop.f32.mrf.mxu0
      %v477 = vadd.f32 %v394, %v476
      %478 = vdwg.mxu0
      %479 = vmatpush.msra.mxu0 0.0
      %480 = vmatpush.msra.mxu0 0.0
      %481 = vmatpush.msra.mxu0 0.0
      %482 = vmatpush.msra.mxu0 0.0
      %483 = vmatpush.msra.mxu0 0.0
      %484 = vmatpush.msra.mxu0 0.0
      %485 = vmatpush.msra.mxu0 0.0
      %486 = vmatpush.msra.mxu0 0.0
      %487 = vmatpush.msra.mxu0 0.0
      %488 = vmatpush.msra.mxu0 0.0
      %489 = vmatpush.msra.mxu0 0.0
      %490 = vmatpush.msra.mxu0 0.0
      %491 = vmatpush.msra.mxu0 0.0
      %492 = vmatpush.msra.mxu0 0.0
      %493 = vmatpush.msra.mxu0 0.0
      %494 = vmatpush.msra.mxu0 %v322
      %495 = vmatmul.f32.gmra.mxu0 %v437
      %v496 = vpop.f32.mrf.mxu0
      %v497 = vadd.f32 %v414, %v496
      %498 = vdwg.mxu0
      %499 = vmatpush.msra.mxu0 0.0
      %500 = vmatpush.msra.mxu0 0.0
      %501 = vmatpush.msra.mxu0 0.0
      %502 = vmatpush.msra.mxu0 0.0
      %503 = vmatpush.msra.mxu0 0.0
      %504 = vmatpush.msra.mxu0 0.0
      %505 = vmatpush.msra.mxu0 0.0
      %506 = vmatpush.msra.mxu0 0.0
      %507 = vmatpush.msra.mxu0 0.0
      %508 = vmatpush.msra.mxu0 0.0
      %509 = vmatpush.msra.mxu0 0.0
      %510 = vmatpush.msra.mxu0 0.0
      %511 = vmatpush.msra.mxu0 0.0
      %512 = vmatpush.msra.mxu0 0.0
      %513 = vmatpush.msra.mxu0 0.0
      %514 = vmatpush.msra.mxu0 %v323
      %515 = vmatmul.f32.gmra.mxu0 %v437
      %v516 = vpop.f32.mrf.mxu0
      %v517 = vadd.f32 %v434, %v516
      %518 = vdwg.mxu0
      %s519 = scalar_lea.vmem %s285, 16
      %v520 = vld [vmem:[%s519] sm:$0xff]
      %521 = vrot.lane.b32.xlu0 %v320, 124
      %v522 = vpop.permute.xlu0 %521
      %523 = vrot.lane.b32.xlu0 %v321, 124
      %v524 = vpop.permute.xlu0 %523
      %525 = vrot.lane.b32.xlu0 %v322, 124
      %v526 = vpop.permute.xlu0 %525
      %527 = vrot.lane.b32.xlu0 %v323, 124
      %v528 = vpop.permute.xlu0 %527
      %529 = vrot.lane.b32.xlu0 %v324, 124
      %v530 = vpop.permute.xlu0 %529
      %vm531 = vcmask 1014784
      %v532 = vsel %vm531, %v522, %v524
      %v533 = vsel %vm531, %v524, %v526
      %v534 = vsel %vm531, %v526, %v528
      %v535 = vsel %vm531, %v528, %v530
      %v541 = vsel %vm352, %v520, 0
      %543 = vmatpush.msra.mxu0 0.0
      %544 = vmatpush.msra.mxu0 0.0
      %545 = vmatpush.msra.mxu0 0.0
      %546 = vmatpush.msra.mxu0 0.0
      %547 = vmatpush.msra.mxu0 0.0
      %548 = vmatpush.msra.mxu0 0.0
      %549 = vmatpush.msra.mxu0 0.0
      %550 = vmatpush.msra.mxu0 0.0
      %551 = vmatpush.msra.mxu0 0.0
      %552 = vmatpush.msra.mxu0 0.0
      %553 = vmatpush.msra.mxu0 0.0
      %554 = vmatpush.msra.mxu0 0.0
      %555 = vmatpush.msra.mxu0 0.0
      %556 = vmatpush.msra.mxu0 0.0
      %557 = vmatpush.msra.mxu0 0.0
      %558 = vmatpush.msra.mxu0 %v532
      %559 = vmatmul.f32.gmra.mxu0 %v541
      %v560 = vpop.f32.mrf.mxu0
      %v561 = vadd.f32 0.0, %v560
      %562 = vdwg.mxu0
      %563 = vmatpush.msra.mxu0 0.0
      %564 = vmatpush.msra.mxu0 0.0
      %565 = vmatpush.msra.mxu0 0.0
      %566 = vmatpush.msra.mxu0 0.0
      %567 = vmatpush.msra.mxu0 0.0
      %568 = vmatpush.msra.mxu0 0.0
      %569 = vmatpush.msra.mxu0 0.0
      %570 = vmatpush.msra.mxu0 0.0
      %571 = vmatpush.msra.mxu0 0.0
      %572 = vmatpush.msra.mxu0 0.0
      %573 = vmatpush.msra.mxu0 0.0
      %574 = vmatpush.msra.mxu0 0.0
      %575 = vmatpush.msra.mxu0 0.0
      %576 = vmatpush.msra.mxu0 0.0
      %577 = vmatpush.msra.mxu0 0.0
      %578 = vmatpush.msra.mxu0 %v533
      %579 = vmatmul.f32.gmra.mxu0 %v541
      %v580 = vpop.f32.mrf.mxu0
      %v581 = vadd.f32 0.0, %v580
      %582 = vdwg.mxu0
      %583 = vmatpush.msra.mxu0 0.0
      %584 = vmatpush.msra.mxu0 0.0
      %585 = vmatpush.msra.mxu0 0.0
      %586 = vmatpush.msra.mxu0 0.0
      %587 = vmatpush.msra.mxu0 0.0
      %588 = vmatpush.msra.mxu0 0.0
      %589 = vmatpush.msra.mxu0 0.0
      %590 = vmatpush.msra.mxu0 0.0
      %591 = vmatpush.msra.mxu0 0.0
      %592 = vmatpush.msra.mxu0 0.0
      %593 = vmatpush.msra.mxu0 0.0
      %594 = vmatpush.msra.mxu0 0.0
      %595 = vmatpush.msra.mxu0 0.0
      %596 = vmatpush.msra.mxu0 0.0
      %597 = vmatpush.msra.mxu0 0.0
      %598 = vmatpush.msra.mxu0 %v534
      %599 = vmatmul.f32.gmra.mxu0 %v541
      %v600 = vpop.f32.mrf.mxu0
      %v601 = vadd.f32 0.0, %v600
      %602 = vdwg.mxu0
      %603 = vmatpush.msra.mxu0 0.0
      %604 = vmatpush.msra.mxu0 0.0
      %605 = vmatpush.msra.mxu0 0.0
      %606 = vmatpush.msra.mxu0 0.0
      %607 = vmatpush.msra.mxu0 0.0
      %608 = vmatpush.msra.mxu0 0.0
      %609 = vmatpush.msra.mxu0 0.0
      %610 = vmatpush.msra.mxu0 0.0
      %611 = vmatpush.msra.mxu0 0.0
      %612 = vmatpush.msra.mxu0 0.0
      %613 = vmatpush.msra.mxu0 0.0
      %614 = vmatpush.msra.mxu0 0.0
      %615 = vmatpush.msra.mxu0 0.0
      %616 = vmatpush.msra.mxu0 0.0
      %617 = vmatpush.msra.mxu0 0.0
      %618 = vmatpush.msra.mxu0 %v535
      %619 = vmatmul.f32.gmra.mxu0 %v541
      %v620 = vpop.f32.mrf.mxu0
      %v621 = vadd.f32 0.0, %v620
      %622 = vdwg.mxu0
      %v623 = vadd.f32 %v457, %v561
      %v624 = vadd.f32 %v477, %v581
      %v625 = vadd.f32 %v497, %v601
      %v626 = vadd.f32 %v517, %v621
      %s627 = scalar_lea.vmem %s285, 24
      %v628 = vld [vmem:[%s627] sm:$0xff]
      %629 = vrot.lane.b32.xlu0 %v320, 88
      %v630 = vpop.permute.xlu0 %629
      %631 = vrot.lane.b32.xlu0 %v321, 88
      %v632 = vpop.permute.xlu0 %631
      %633 = vrot.lane.b32.xlu0 %v322, 88
      %v634 = vpop.permute.xlu0 %633
      %635 = vrot.lane.b32.xlu0 %v323, 88
      %v636 = vpop.permute.xlu0 %635
      %637 = vrot.lane.b32.xlu0 %v324, 88
      %v638 = vpop.permute.xlu0 %637
      %vm639 = vcmask 719872
      %v640 = vsel %vm639, %v630, %v632
      %v641 = vsel %vm639, %v632, %v634
      %v642 = vsel %vm639, %v634, %v636
      %v643 = vsel %vm639, %v636, %v638
      %v649 = vsel %vm352, %v628, 0
      %651 = vmatpush.msra.mxu0 0.0
      %652 = vmatpush.msra.mxu0 0.0
      %653 = vmatpush.msra.mxu0 0.0
      %654 = vmatpush.msra.mxu0 0.0
      %655 = vmatpush.msra.mxu0 0.0
      %656 = vmatpush.msra.mxu0 0.0
      %657 = vmatpush.msra.mxu0 0.0
      %658 = vmatpush.msra.mxu0 0.0
      %659 = vmatpush.msra.mxu0 0.0
      %660 = vmatpush.msra.mxu0 0.0
      %661 = vmatpush.msra.mxu0 0.0
      %662 = vmatpush.msra.mxu0 0.0
      %663 = vmatpush.msra.mxu0 0.0
      %664 = vmatpush.msra.mxu0 0.0
      %665 = vmatpush.msra.mxu0 0.0
      %666 = vmatpush.msra.mxu0 %v640
      %667 = vmatmul.f32.gmra.mxu0 %v649
      %v668 = vpop.f32.mrf.mxu0
      %v669 = vadd.f32 0.0, %v668
      %670 = vdwg.mxu0
      %671 = vmatpush.msra.mxu0 0.0
      %672 = vmatpush.msra.mxu0 0.0
      %673 = vmatpush.msra.mxu0 0.0
      %674 = vmatpush.msra.mxu0 0.0
      %675 = vmatpush.msra.mxu0 0.0
      %676 = vmatpush.msra.mxu0 0.0
      %677 = vmatpush.msra.mxu0 0.0
      %678 = vmatpush.msra.mxu0 0.0
      %679 = vmatpush.msra.mxu0 0.0
      %680 = vmatpush.msra.mxu0 0.0
      %681 = vmatpush.msra.mxu0 0.0
      %682 = vmatpush.msra.mxu0 0.0
      %683 = vmatpush.msra.mxu0 0.0
      %684 = vmatpush.msra.mxu0 0.0
      %685 = vmatpush.msra.mxu0 0.0
      %686 = vmatpush.msra.mxu0 %v641
      %687 = vmatmul.f32.gmra.mxu0 %v649
      %v688 = vpop.f32.mrf.mxu0
      %v689 = vadd.f32 0.0, %v688
      %690 = vdwg.mxu0
      %691 = vmatpush.msra.mxu0 0.0
      %692 = vmatpush.msra.mxu0 0.0
      %693 = vmatpush.msra.mxu0 0.0
      %694 = vmatpush.msra.mxu0 0.0
      %695 = vmatpush.msra.mxu0 0.0
      %696 = vmatpush.msra.mxu0 0.0
      %697 = vmatpush.msra.mxu0 0.0
      %698 = vmatpush.msra.mxu0 0.0
      %699 = vmatpush.msra.mxu0 0.0
      %700 = vmatpush.msra.mxu0 0.0
      %701 = vmatpush.msra.mxu0 0.0
      %702 = vmatpush.msra.mxu0 0.0
      %703 = vmatpush.msra.mxu0 0.0
      %704 = vmatpush.msra.mxu0 0.0
      %705 = vmatpush.msra.mxu0 0.0
      %706 = vmatpush.msra.mxu0 %v642
      %707 = vmatmul.f32.gmra.mxu0 %v649
      %v708 = vpop.f32.mrf.mxu0
      %v709 = vadd.f32 0.0, %v708
      %710 = vdwg.mxu0
      %711 = vmatpush.msra.mxu0 0.0
      %712 = vmatpush.msra.mxu0 0.0
      %713 = vmatpush.msra.mxu0 0.0
      %714 = vmatpush.msra.mxu0 0.0
      %715 = vmatpush.msra.mxu0 0.0
      %716 = vmatpush.msra.mxu0 0.0
      %717 = vmatpush.msra.mxu0 0.0
      %718 = vmatpush.msra.mxu0 0.0
      %719 = vmatpush.msra.mxu0 0.0
      %720 = vmatpush.msra.mxu0 0.0
      %721 = vmatpush.msra.mxu0 0.0
      %722 = vmatpush.msra.mxu0 0.0
      %723 = vmatpush.msra.mxu0 0.0
      %724 = vmatpush.msra.mxu0 0.0
      %725 = vmatpush.msra.mxu0 0.0
      %726 = vmatpush.msra.mxu0 %v643
      %727 = vmatmul.f32.gmra.mxu0 %v649
      %v728 = vpop.f32.mrf.mxu0
      %v729 = vadd.f32 0.0, %v728
      %730 = vdwg.mxu0
      %v731 = vadd.f32 %v623, %v669
      %v732 = vadd.f32 %v624, %v689
      %v733 = vadd.f32 %v625, %v709
      %v734 = vadd.f32 %v626, %v729
      %s735 = scalar_lea.vmem %s285, 32
      %v736 = vld [vmem:[%s735] sm:$0xff]
      %737 = vrot.lane.b32.xlu0 %v320, 86
      %v738 = vpop.permute.xlu0 %737
      %739 = vrot.lane.b32.xlu0 %v321, 86
      %v740 = vpop.permute.xlu0 %739
      %741 = vrot.lane.b32.xlu0 %v322, 86
      %v742 = vpop.permute.xlu0 %741
      %743 = vrot.lane.b32.xlu0 %v323, 86
      %v744 = vpop.permute.xlu0 %743
      %745 = vrot.lane.b32.xlu0 %v324, 86
      %v746 = vpop.permute.xlu0 %745
      %vm747 = vcmask 703488
      %v748 = vsel %vm747, %v738, %v740
      %v749 = vsel %vm747, %v740, %v742
      %v750 = vsel %vm747, %v742, %v744
      %v751 = vsel %vm747, %v744, %v746
      %v757 = vsel %vm352, %v736, 0
      %759 = vmatpush.msra.mxu0 0.0
      %760 = vmatpush.msra.mxu0 0.0
      %761 = vmatpush.msra.mxu0 0.0
      %762 = vmatpush.msra.mxu0 0.0
      %763 = vmatpush.msra.mxu0 0.0
      %764 = vmatpush.msra.mxu0 0.0
      %765 = vmatpush.msra.mxu0 0.0
      %766 = vmatpush.msra.mxu0 0.0
      %767 = vmatpush.msra.mxu0 0.0
      %768 = vmatpush.msra.mxu0 0.0
      %769 = vmatpush.msra.mxu0 0.0
      %770 = vmatpush.msra.mxu0 0.0
      %771 = vmatpush.msra.mxu0 0.0
      %772 = vmatpush.msra.mxu0 0.0
      %773 = vmatpush.msra.mxu0 0.0
      %774 = vmatpush.msra.mxu0 %v748
      %775 = vmatmul.f32.gmra.mxu0 %v757
      %v776 = vpop.f32.mrf.mxu0
      %v777 = vadd.f32 0.0, %v776
      %778 = vdwg.mxu0
      %779 = vmatpush.msra.mxu0 0.0
      %780 = vmatpush.msra.mxu0 0.0
      %781 = vmatpush.msra.mxu0 0.0
      %782 = vmatpush.msra.mxu0 0.0
      %783 = vmatpush.msra.mxu0 0.0
      %784 = vmatpush.msra.mxu0 0.0
      %785 = vmatpush.msra.mxu0 0.0
      %786 = vmatpush.msra.mxu0 0.0
      %787 = vmatpush.msra.mxu0 0.0
      %788 = vmatpush.msra.mxu0 0.0
      %789 = vmatpush.msra.mxu0 0.0
      %790 = vmatpush.msra.mxu0 0.0
      %791 = vmatpush.msra.mxu0 0.0
      %792 = vmatpush.msra.mxu0 0.0
      %793 = vmatpush.msra.mxu0 0.0
      %794 = vmatpush.msra.mxu0 %v749
      %795 = vmatmul.f32.gmra.mxu0 %v757
      %v796 = vpop.f32.mrf.mxu0
      %v797 = vadd.f32 0.0, %v796
      %798 = vdwg.mxu0
      %799 = vmatpush.msra.mxu0 0.0
      %800 = vmatpush.msra.mxu0 0.0
      %801 = vmatpush.msra.mxu0 0.0
      %802 = vmatpush.msra.mxu0 0.0
      %803 = vmatpush.msra.mxu0 0.0
      %804 = vmatpush.msra.mxu0 0.0
      %805 = vmatpush.msra.mxu0 0.0
      %806 = vmatpush.msra.mxu0 0.0
      %807 = vmatpush.msra.mxu0 0.0
      %808 = vmatpush.msra.mxu0 0.0
      %809 = vmatpush.msra.mxu0 0.0
      %810 = vmatpush.msra.mxu0 0.0
      %811 = vmatpush.msra.mxu0 0.0
      %812 = vmatpush.msra.mxu0 0.0
      %813 = vmatpush.msra.mxu0 0.0
      %814 = vmatpush.msra.mxu0 %v750
      %815 = vmatmul.f32.gmra.mxu0 %v757
      %v816 = vpop.f32.mrf.mxu0
      %v817 = vadd.f32 0.0, %v816
      %818 = vdwg.mxu0
      %819 = vmatpush.msra.mxu0 0.0
      %820 = vmatpush.msra.mxu0 0.0
      %821 = vmatpush.msra.mxu0 0.0
      %822 = vmatpush.msra.mxu0 0.0
      %823 = vmatpush.msra.mxu0 0.0
      %824 = vmatpush.msra.mxu0 0.0
      %825 = vmatpush.msra.mxu0 0.0
      %826 = vmatpush.msra.mxu0 0.0
      %827 = vmatpush.msra.mxu0 0.0
      %828 = vmatpush.msra.mxu0 0.0
      %829 = vmatpush.msra.mxu0 0.0
      %830 = vmatpush.msra.mxu0 0.0
      %831 = vmatpush.msra.mxu0 0.0
      %832 = vmatpush.msra.mxu0 0.0
      %833 = vmatpush.msra.mxu0 0.0
      %834 = vmatpush.msra.mxu0 %v751
      %835 = vmatmul.f32.gmra.mxu0 %v757
      %v836 = vpop.f32.mrf.mxu0
      %v837 = vadd.f32 0.0, %v836
      %838 = vdwg.mxu0
      %v839 = vadd.f32 %v731, %v777
      %v840 = vadd.f32 %v732, %v797
      %v841 = vadd.f32 %v733, %v817
      %v842 = vadd.f32 %v734, %v837
      %s843 = scalar_lea.vmem %s285, 40
      %v844 = vld [vmem:[%s843] sm:$0xff]
      %845 = vrot.lane.b32.xlu0 %v320, 84
      %v846 = vpop.permute.xlu0 %845
      %847 = vrot.lane.b32.xlu0 %v321, 84
      %v848 = vpop.permute.xlu0 %847
      %849 = vrot.lane.b32.xlu0 %v322, 84
      %v850 = vpop.permute.xlu0 %849
      %851 = vrot.lane.b32.xlu0 %v323, 84
      %v852 = vpop.permute.xlu0 %851
      %853 = vrot.lane.b32.xlu0 %v324, 84
      %v854 = vpop.permute.xlu0 %853
      %vm855 = vcmask 687104
      %v856 = vsel %vm855, %v846, %v848
      %v857 = vsel %vm855, %v848, %v850
      %v858 = vsel %vm855, %v850, %v852
      %v859 = vsel %vm855, %v852, %v854
      %v865 = vsel %vm352, %v844, 0
      %867 = vmatpush.msra.mxu0 0.0
      %868 = vmatpush.msra.mxu0 0.0
      %869 = vmatpush.msra.mxu0 0.0
      %870 = vmatpush.msra.mxu0 0.0
      %871 = vmatpush.msra.mxu0 0.0
      %872 = vmatpush.msra.mxu0 0.0
      %873 = vmatpush.msra.mxu0 0.0
      %874 = vmatpush.msra.mxu0 0.0
      %875 = vmatpush.msra.mxu0 0.0
      %876 = vmatpush.msra.mxu0 0.0
      %877 = vmatpush.msra.mxu0 0.0
      %878 = vmatpush.msra.mxu0 0.0
      %879 = vmatpush.msra.mxu0 0.0
      %880 = vmatpush.msra.mxu0 0.0
      %881 = vmatpush.msra.mxu0 0.0
      %882 = vmatpush.msra.mxu0 %v856
      %883 = vmatmul.f32.gmra.mxu0 %v865
      %v884 = vpop.f32.mrf.mxu0
      %v885 = vadd.f32 0.0, %v884
      %886 = vdwg.mxu0
      %887 = vmatpush.msra.mxu0 0.0
      %888 = vmatpush.msra.mxu0 0.0
      %889 = vmatpush.msra.mxu0 0.0
      %890 = vmatpush.msra.mxu0 0.0
      %891 = vmatpush.msra.mxu0 0.0
      %892 = vmatpush.msra.mxu0 0.0
      %893 = vmatpush.msra.mxu0 0.0
      %894 = vmatpush.msra.mxu0 0.0
      %895 = vmatpush.msra.mxu0 0.0
      %896 = vmatpush.msra.mxu0 0.0
      %897 = vmatpush.msra.mxu0 0.0
      %898 = vmatpush.msra.mxu0 0.0
      %899 = vmatpush.msra.mxu0 0.0
      %900 = vmatpush.msra.mxu0 0.0
      %901 = vmatpush.msra.mxu0 0.0
      %902 = vmatpush.msra.mxu0 %v857
      %903 = vmatmul.f32.gmra.mxu0 %v865
      %v904 = vpop.f32.mrf.mxu0
      %v905 = vadd.f32 0.0, %v904
      %906 = vdwg.mxu0
      %907 = vmatpush.msra.mxu0 0.0
      %908 = vmatpush.msra.mxu0 0.0
      %909 = vmatpush.msra.mxu0 0.0
      %910 = vmatpush.msra.mxu0 0.0
      %911 = vmatpush.msra.mxu0 0.0
      %912 = vmatpush.msra.mxu0 0.0
      %913 = vmatpush.msra.mxu0 0.0
      %914 = vmatpush.msra.mxu0 0.0
      %915 = vmatpush.msra.mxu0 0.0
      %916 = vmatpush.msra.mxu0 0.0
      %917 = vmatpush.msra.mxu0 0.0
      %918 = vmatpush.msra.mxu0 0.0
      %919 = vmatpush.msra.mxu0 0.0
      %920 = vmatpush.msra.mxu0 0.0
      %921 = vmatpush.msra.mxu0 0.0
      %922 = vmatpush.msra.mxu0 %v858
      %923 = vmatmul.f32.gmra.mxu0 %v865
      %v924 = vpop.f32.mrf.mxu0
      %v925 = vadd.f32 0.0, %v924
      %926 = vdwg.mxu0
      %927 = vmatpush.msra.mxu0 0.0
      %928 = vmatpush.msra.mxu0 0.0
      %929 = vmatpush.msra.mxu0 0.0
      %930 = vmatpush.msra.mxu0 0.0
      %931 = vmatpush.msra.mxu0 0.0
      %932 = vmatpush.msra.mxu0 0.0
      %933 = vmatpush.msra.mxu0 0.0
      %934 = vmatpush.msra.mxu0 0.0
      %935 = vmatpush.msra.mxu0 0.0
      %936 = vmatpush.msra.mxu0 0.0
      %937 = vmatpush.msra.mxu0 0.0
      %938 = vmatpush.msra.mxu0 0.0
      %939 = vmatpush.msra.mxu0 0.0
      %940 = vmatpush.msra.mxu0 0.0
      %941 = vmatpush.msra.mxu0 0.0
      %942 = vmatpush.msra.mxu0 %v859
      %943 = vmatmul.f32.gmra.mxu0 %v865
      %v944 = vpop.f32.mrf.mxu0
      %v945 = vadd.f32 0.0, %v944
      %946 = vdwg.mxu0
      %v947 = vadd.f32 %v839, %v885
      %v948 = vadd.f32 %v840, %v905
      %v949 = vadd.f32 %v841, %v925
      %v950 = vadd.f32 %v842, %v945
      %s951 = scalar_lea.vmem %s285, 48
      %v952 = vld [vmem:[%s951] sm:$0xff]
      %953 = vrot.lane.b32.xlu0 %v320, 48
      %v954 = vpop.permute.xlu0 %953
      %955 = vrot.lane.b32.xlu0 %v321, 48
      %v956 = vpop.permute.xlu0 %955
      %957 = vrot.lane.b32.xlu0 %v322, 48
      %v958 = vpop.permute.xlu0 %957
      %959 = vrot.lane.b32.xlu0 %v323, 48
      %v960 = vpop.permute.xlu0 %959
      %961 = vrot.lane.b32.xlu0 %v324, 48
      %v962 = vpop.permute.xlu0 %961
      %vm963 = vcmask 392192
      %v964 = vsel %vm963, %v954, %v956
      %v965 = vsel %vm963, %v956, %v958
      %v966 = vsel %vm963, %v958, %v960
      %v967 = vsel %vm963, %v960, %v962
      %v973 = vsel %vm352, %v952, 0
      %975 = vmatpush.msra.mxu0 0.0
      %976 = vmatpush.msra.mxu0 0.0
      %977 = vmatpush.msra.mxu0 0.0
      %978 = vmatpush.msra.mxu0 0.0
      %979 = vmatpush.msra.mxu0 0.0
      %980 = vmatpush.msra.mxu0 0.0
      %981 = vmatpush.msra.mxu0 0.0
      %982 = vmatpush.msra.mxu0 0.0
      %983 = vmatpush.msra.mxu0 0.0
      %984 = vmatpush.msra.mxu0 0.0
      %985 = vmatpush.msra.mxu0 0.0
      %986 = vmatpush.msra.mxu0 0.0
      %987 = vmatpush.msra.mxu0 0.0
      %988 = vmatpush.msra.mxu0 0.0
      %989 = vmatpush.msra.mxu0 0.0
      %990 = vmatpush.msra.mxu0 %v964
      %991 = vmatmul.f32.gmra.mxu0 %v973
      %v992 = vpop.f32.mrf.mxu0
      %v993 = vadd.f32 0.0, %v992
      %994 = vdwg.mxu0
      %995 = vmatpush.msra.mxu0 0.0
      %996 = vmatpush.msra.mxu0 0.0
      %997 = vmatpush.msra.mxu0 0.0
      %998 = vmatpush.msra.mxu0 0.0
      %999 = vmatpush.msra.mxu0 0.0
      %1000 = vmatpush.msra.mxu0 0.0
      %1001 = vmatpush.msra.mxu0 0.0
      %1002 = vmatpush.msra.mxu0 0.0
      %1003 = vmatpush.msra.mxu0 0.0
      %1004 = vmatpush.msra.mxu0 0.0
      %1005 = vmatpush.msra.mxu0 0.0
      %1006 = vmatpush.msra.mxu0 0.0
      %1007 = vmatpush.msra.mxu0 0.0
      %1008 = vmatpush.msra.mxu0 0.0
      %1009 = vmatpush.msra.mxu0 0.0
      %1010 = vmatpush.msra.mxu0 %v965
      %1011 = vmatmul.f32.gmra.mxu0 %v973
      %v1012 = vpop.f32.mrf.mxu0
      %v1013 = vadd.f32 0.0, %v1012
      %1014 = vdwg.mxu0
      %1015 = vmatpush.msra.mxu0 0.0
      %1016 = vmatpush.msra.mxu0 0.0
      %1017 = vmatpush.msra.mxu0 0.0
      %1018 = vmatpush.msra.mxu0 0.0
      %1019 = vmatpush.msra.mxu0 0.0
      %1020 = vmatpush.msra.mxu0 0.0
      %1021 = vmatpush.msra.mxu0 0.0
      %1022 = vmatpush.msra.mxu0 0.0
      %1023 = vmatpush.msra.mxu0 0.0
      %1024 = vmatpush.msra.mxu0 0.0
      %1025 = vmatpush.msra.mxu0 0.0
      %1026 = vmatpush.msra.mxu0 0.0
      %1027 = vmatpush.msra.mxu0 0.0
      %1028 = vmatpush.msra.mxu0 0.0
      %1029 = vmatpush.msra.mxu0 0.0
      %1030 = vmatpush.msra.mxu0 %v966
      %1031 = vmatmul.f32.gmra.mxu0 %v973
      %v1032 = vpop.f32.mrf.mxu0
      %v1033 = vadd.f32 0.0, %v1032
      %1034 = vdwg.mxu0
      %1035 = vmatpush.msra.mxu0 0.0
      %1036 = vmatpush.msra.mxu0 0.0
      %1037 = vmatpush.msra.mxu0 0.0
      %1038 = vmatpush.msra.mxu0 0.0
      %1039 = vmatpush.msra.mxu0 0.0
      %1040 = vmatpush.msra.mxu0 0.0
      %1041 = vmatpush.msra.mxu0 0.0
      %1042 = vmatpush.msra.mxu0 0.0
      %1043 = vmatpush.msra.mxu0 0.0
      %1044 = vmatpush.msra.mxu0 0.0
      %1045 = vmatpush.msra.mxu0 0.0
      %1046 = vmatpush.msra.mxu0 0.0
      %1047 = vmatpush.msra.mxu0 0.0
      %1048 = vmatpush.msra.mxu0 0.0
      %1049 = vmatpush.msra.mxu0 0.0
      %1050 = vmatpush.msra.mxu0 %v967
      %1051 = vmatmul.f32.gmra.mxu0 %v973
      %v1052 = vpop.f32.mrf.mxu0
      %v1053 = vadd.f32 0.0, %v1052
      %1054 = vdwg.mxu0
      %v1055 = vadd.f32 %v947, %v993
      %v1056 = vadd.f32 %v948, %v1013
      %v1057 = vadd.f32 %v949, %v1033
      %v1058 = vadd.f32 %v950, %v1053
      %s1059 = scalar_lea.vmem %s285, 56
      %v1060 = vld [vmem:[%s1059] sm:$0xff]
      %1061 = vrot.lane.b32.xlu0 %v320, 46
      %v1062 = vpop.permute.xlu0 %1061
      %1063 = vrot.lane.b32.xlu0 %v321, 46
      %v1064 = vpop.permute.xlu0 %1063
      %1065 = vrot.lane.b32.xlu0 %v322, 46
      %v1066 = vpop.permute.xlu0 %1065
      %1067 = vrot.lane.b32.xlu0 %v323, 46
      %v1068 = vpop.permute.xlu0 %1067
      %1069 = vrot.lane.b32.xlu0 %v324, 46
      %v1070 = vpop.permute.xlu0 %1069
      %vm1071 = vcmask 375808
      %v1072 = vsel %vm1071, %v1062, %v1064
      %v1073 = vsel %vm1071, %v1064, %v1066
      %v1074 = vsel %vm1071, %v1066, %v1068
      %v1075 = vsel %vm1071, %v1068, %v1070
      %v1081 = vsel %vm352, %v1060, 0
      %1083 = vmatpush.msra.mxu0 0.0
      %1084 = vmatpush.msra.mxu0 0.0
      %1085 = vmatpush.msra.mxu0 0.0
      %1086 = vmatpush.msra.mxu0 0.0
      %1087 = vmatpush.msra.mxu0 0.0
      %1088 = vmatpush.msra.mxu0 0.0
      %1089 = vmatpush.msra.mxu0 0.0
      %1090 = vmatpush.msra.mxu0 0.0
      %1091 = vmatpush.msra.mxu0 0.0
      %1092 = vmatpush.msra.mxu0 0.0
      %1093 = vmatpush.msra.mxu0 0.0
      %1094 = vmatpush.msra.mxu0 0.0
      %1095 = vmatpush.msra.mxu0 0.0
      %1096 = vmatpush.msra.mxu0 0.0
      %1097 = vmatpush.msra.mxu0 0.0
      %1098 = vmatpush.msra.mxu0 %v1072
      %1099 = vmatmul.f32.gmra.mxu0 %v1081
      %v1100 = vpop.f32.mrf.mxu0
      %v1101 = vadd.f32 0.0, %v1100
      %1102 = vdwg.mxu0
      %1103 = vmatpush.msra.mxu0 0.0
      %1104 = vmatpush.msra.mxu0 0.0
      %1105 = vmatpush.msra.mxu0 0.0
      %1106 = vmatpush.msra.mxu0 0.0
      %1107 = vmatpush.msra.mxu0 0.0
      %1108 = vmatpush.msra.mxu0 0.0
      %1109 = vmatpush.msra.mxu0 0.0
      %1110 = vmatpush.msra.mxu0 0.0
      %1111 = vmatpush.msra.mxu0 0.0
      %1112 = vmatpush.msra.mxu0 0.0
      %1113 = vmatpush.msra.mxu0 0.0
      %1114 = vmatpush.msra.mxu0 0.0
      %1115 = vmatpush.msra.mxu0 0.0
      %1116 = vmatpush.msra.mxu0 0.0
      %1117 = vmatpush.msra.mxu0 0.0
      %1118 = vmatpush.msra.mxu0 %v1073
      %1119 = vmatmul.f32.gmra.mxu0 %v1081
      %v1120 = vpop.f32.mrf.mxu0
      %v1121 = vadd.f32 0.0, %v1120
      %1122 = vdwg.mxu0
      %1123 = vmatpush.msra.mxu0 0.0
      %1124 = vmatpush.msra.mxu0 0.0
      %1125 = vmatpush.msra.mxu0 0.0
      %1126 = vmatpush.msra.mxu0 0.0
      %1127 = vmatpush.msra.mxu0 0.0
      %1128 = vmatpush.msra.mxu0 0.0
      %1129 = vmatpush.msra.mxu0 0.0
      %1130 = vmatpush.msra.mxu0 0.0
      %1131 = vmatpush.msra.mxu0 0.0
      %1132 = vmatpush.msra.mxu0 0.0
      %1133 = vmatpush.msra.mxu0 0.0
      %1134 = vmatpush.msra.mxu0 0.0
      %1135 = vmatpush.msra.mxu0 0.0
      %1136 = vmatpush.msra.mxu0 0.0
      %1137 = vmatpush.msra.mxu0 0.0
      %1138 = vmatpush.msra.mxu0 %v1074
      %1139 = vmatmul.f32.gmra.mxu0 %v1081
      %v1140 = vpop.f32.mrf.mxu0
      %v1141 = vadd.f32 0.0, %v1140
      %1142 = vdwg.mxu0
      %1143 = vmatpush.msra.mxu0 0.0
      %1144 = vmatpush.msra.mxu0 0.0
      %1145 = vmatpush.msra.mxu0 0.0
      %1146 = vmatpush.msra.mxu0 0.0
      %1147 = vmatpush.msra.mxu0 0.0
      %1148 = vmatpush.msra.mxu0 0.0
      %1149 = vmatpush.msra.mxu0 0.0
      %1150 = vmatpush.msra.mxu0 0.0
      %1151 = vmatpush.msra.mxu0 0.0
      %1152 = vmatpush.msra.mxu0 0.0
      %1153 = vmatpush.msra.mxu0 0.0
      %1154 = vmatpush.msra.mxu0 0.0
      %1155 = vmatpush.msra.mxu0 0.0
      %1156 = vmatpush.msra.mxu0 0.0
      %1157 = vmatpush.msra.mxu0 0.0
      %1158 = vmatpush.msra.mxu0 %v1075
      %1159 = vmatmul.f32.gmra.mxu0 %v1081
      %v1160 = vpop.f32.mrf.mxu0
      %v1161 = vadd.f32 0.0, %v1160
      %1162 = vdwg.mxu0
      %v1163 = vadd.f32 %v1055, %v1101
      %v1164 = vadd.f32 %v1056, %v1121
      %v1165 = vadd.f32 %v1057, %v1141
      %v1166 = vadd.f32 %v1058, %v1161
      %s1167 = scalar_lea.vmem %s285, 64
      %v1168 = vld [vmem:[%s1167] sm:$0xff]
      %1169 = vrot.lane.b32.xlu0 %v320, 44
      %v1170 = vpop.permute.xlu0 %1169
      %1171 = vrot.lane.b32.xlu0 %v321, 44
      %v1172 = vpop.permute.xlu0 %1171
      %1173 = vrot.lane.b32.xlu0 %v322, 44
      %v1174 = vpop.permute.xlu0 %1173
      %1175 = vrot.lane.b32.xlu0 %v323, 44
      %v1176 = vpop.permute.xlu0 %1175
      %1177 = vrot.lane.b32.xlu0 %v324, 44
      %v1178 = vpop.permute.xlu0 %1177
      %vm1179 = vcmask 359424
      %v1180 = vsel %vm1179, %v1170, %v1172
      %v1181 = vsel %vm1179, %v1172, %v1174
      %v1182 = vsel %vm1179, %v1174, %v1176
      %v1183 = vsel %vm1179, %v1176, %v1178
      %v1189 = vsel %vm352, %v1168, 0
      %1191 = vmatpush.msra.mxu0 0.0
      %1192 = vmatpush.msra.mxu0 0.0
      %1193 = vmatpush.msra.mxu0 0.0
      %1194 = vmatpush.msra.mxu0 0.0
      %1195 = vmatpush.msra.mxu0 0.0
      %1196 = vmatpush.msra.mxu0 0.0
      %1197 = vmatpush.msra.mxu0 0.0
      %1198 = vmatpush.msra.mxu0 0.0
      %1199 = vmatpush.msra.mxu0 0.0
      %1200 = vmatpush.msra.mxu0 0.0
      %1201 = vmatpush.msra.mxu0 0.0
      %1202 = vmatpush.msra.mxu0 0.0
      %1203 = vmatpush.msra.mxu0 0.0
      %1204 = vmatpush.msra.mxu0 0.0
      %1205 = vmatpush.msra.mxu0 0.0
      %1206 = vmatpush.msra.mxu0 %v1180
      %1207 = vmatmul.f32.gmra.mxu0 %v1189
      %v1208 = vpop.f32.mrf.mxu0
      %v1209 = vadd.f32 0.0, %v1208
      %1210 = vdwg.mxu0
      %1211 = vmatpush.msra.mxu0 0.0
      %1212 = vmatpush.msra.mxu0 0.0
      %1213 = vmatpush.msra.mxu0 0.0
      %1214 = vmatpush.msra.mxu0 0.0
      %1215 = vmatpush.msra.mxu0 0.0
      %1216 = vmatpush.msra.mxu0 0.0
      %1217 = vmatpush.msra.mxu0 0.0
      %1218 = vmatpush.msra.mxu0 0.0
      %1219 = vmatpush.msra.mxu0 0.0
      %1220 = vmatpush.msra.mxu0 0.0
      %1221 = vmatpush.msra.mxu0 0.0
      %1222 = vmatpush.msra.mxu0 0.0
      %1223 = vmatpush.msra.mxu0 0.0
      %1224 = vmatpush.msra.mxu0 0.0
      %1225 = vmatpush.msra.mxu0 0.0
      %1226 = vmatpush.msra.mxu0 %v1181
      %1227 = vmatmul.f32.gmra.mxu0 %v1189
      %v1228 = vpop.f32.mrf.mxu0
      %v1229 = vadd.f32 0.0, %v1228
      %1230 = vdwg.mxu0
      %1231 = vmatpush.msra.mxu0 0.0
      %1232 = vmatpush.msra.mxu0 0.0
      %1233 = vmatpush.msra.mxu0 0.0
      %1234 = vmatpush.msra.mxu0 0.0
      %1235 = vmatpush.msra.mxu0 0.0
      %1236 = vmatpush.msra.mxu0 0.0
      %1237 = vmatpush.msra.mxu0 0.0
      %1238 = vmatpush.msra.mxu0 0.0
      %1239 = vmatpush.msra.mxu0 0.0
      %1240 = vmatpush.msra.mxu0 0.0
      %1241 = vmatpush.msra.mxu0 0.0
      %1242 = vmatpush.msra.mxu0 0.0
      %1243 = vmatpush.msra.mxu0 0.0
      %1244 = vmatpush.msra.mxu0 0.0
      %1245 = vmatpush.msra.mxu0 0.0
      %1246 = vmatpush.msra.mxu0 %v1182
      %1247 = vmatmul.f32.gmra.mxu0 %v1189
      %v1248 = vpop.f32.mrf.mxu0
      %v1249 = vadd.f32 0.0, %v1248
      %1250 = vdwg.mxu0
      %1251 = vmatpush.msra.mxu0 0.0
      %1252 = vmatpush.msra.mxu0 0.0
      %1253 = vmatpush.msra.mxu0 0.0
      %1254 = vmatpush.msra.mxu0 0.0
      %1255 = vmatpush.msra.mxu0 0.0
      %1256 = vmatpush.msra.mxu0 0.0
      %1257 = vmatpush.msra.mxu0 0.0
      %1258 = vmatpush.msra.mxu0 0.0
      %1259 = vmatpush.msra.mxu0 0.0
      %1260 = vmatpush.msra.mxu0 0.0
      %1261 = vmatpush.msra.mxu0 0.0
      %1262 = vmatpush.msra.mxu0 0.0
      %1263 = vmatpush.msra.mxu0 0.0
      %1264 = vmatpush.msra.mxu0 0.0
      %1265 = vmatpush.msra.mxu0 0.0
      %1266 = vmatpush.msra.mxu0 %v1183
      %1267 = vmatmul.f32.gmra.mxu0 %v1189
      %v1268 = vpop.f32.mrf.mxu0
      %v1269 = vadd.f32 0.0, %v1268
      %1270 = vdwg.mxu0
      %v1271 = vadd.f32 %v1163, %v1209
      %v1272 = vadd.f32 %v1164, %v1229
      %v1273 = vadd.f32 %v1165, %v1249
      %v1274 = vadd.f32 %v1166, %v1269
      %v1275 = vld [vmem:[%s303] sm:$0xf]
      %v1277 = vperm.slane %v1275, 0
      %v1278 = vperm.slane %v1275, 1
      %v1279 = vperm.slane %v1275, 2
      %v1280 = vperm.slane %v1275, 3
      %v1285 = vmul.f32 %v1271, %v1277
      %v1286 = vmul.f32 %v1272, %v1278
      %v1287 = vmul.f32 %v1273, %v1279
      %v1288 = vmul.f32 %v1274, %v1280
      %v1289 = vld [vmem:[#allocation2] sm:$0xff]
      %v1290 = vadd.f32 %v1285, %v1286
      %v1291 = vadd.f32 %v1290, %v1287
      %v1292 = vadd.f32 %v1291, %v1288
      %1293 = vadd.xlane.f32.xlu0 %v1292
      %v1294 = vpop.xlane.xlu0 %1293
      %v1295 = vadd.f32 %v1289, %v1294
      %vm1296 = vcmask 7168
      %1297 = vst.msk [vmem:[#allocation2] sm:$0xff] %vm1296, %v1295
      %v1298 = vld [vmem:[#allocation3] sm:$0xff]
      %v1299 = vmul.f32 %v1285, %v1271
      %v1300 = vmul.f32 %v1286, %v1272
      %v1301 = vmul.f32 %v1287, %v1273
      %v1302 = vmul.f32 %v1288, %v1274
      %v1303 = vadd.f32 %v1299, %v1300
      %v1304 = vadd.f32 %v1303, %v1301
      %v1305 = vadd.f32 %v1304, %v1302
      %1306 = vadd.xlane.f32.xlu0 %v1305
      %v1307 = vpop.xlane.xlu0 %1306
      %v1308 = vadd.f32 %v1298, %v1307
      %1309 = vst.msk [vmem:[#allocation3] sm:$0xff] %vm1296, %v1308
      %p1310 = scmp.eq.s32.totalorder %s22, 1
      // Predicated region
      $region41: #{atr_conv.2} parent=35 // pred_check
        %p1311 = pneg %p1310
      $region42: #{atr_conv.2} parent=35 // pred_check_branch
        %1313 = sbr.rel (%p1311) target = $region44
      $region43: #{atr_conv.2} parent=35 // pred_region
        %v1314 = vld [vmem:[#allocation2] sm:$0xff]
        %v1315 = vmul.f32 %v1314, 0.001953125
        %v1316 = vld [vmem:[#allocation3] sm:$0xff]
        %v1317 = vmul.f32 %v1316, 0.001953125
        %v1318 = vmul.f32 %v1315, %v1315
        %v1319 = vsub.f32 %v1317, %v1318
        %v1320 = vmax.f32 %v1319, 0.0
        %v1321 = vadd.f32 %v1320, 1e-05
        %v1322 = vrsqrt.pop %v1321
        %v1323 = vmul.f32 %v1322, %v1321
        %v1324 = vmul.f32 %v1323, %v1322
        %v1325 = vmul.f32 0.5, %v1324
        %v1326 = vsub.f32 1.5, %v1325
        %v1327 = vmul.f32 %v1322, %v1326
        %vm1328 = vweird.f32 %v1321
        %vm1329 = vweird.f32 %v1322
        %vm1330 = vmor %vm1328, %vm1329
        %v1331 = vsel %vm1330, %v1322, %v1327
        %1332 = vst.msk [vmem:[%s308] sm:$0xff] %vm1296, %v1331
        %v1333 = vsub.f32 0.0, %v1315
        %v1334 = vmul.f32 %v1333, %v1331
        %1335 = vst.msk [vmem:[%s312] sm:$0xff] %vm1296, %v1334
      $region44: #{atr_conv.2} parent=35 // pred_fallthru
        _
      %p1336 = scmp.lt.s32.totalorder %s21, 0
      %s1337 = scalar_select %p1336, %s21, 0
      %s1338 = smul.addr %s1337, 8
      %s1339 = scalar_lea.vmem %s4, %s1338
      %p1340 = scmp.lt.s32.totalorder %s21, 0
      %s1341 = scalar_select %p1340, %s21, 0
      %s1342 = smul.addr %s1341, 8
      %s1343 = scalar_lea.vmem %s5, %s1342
      // Predicated region
      $region45: #{atr_conv.2} parent=35 // pred_check
        %p1344 = pneg %p153
      $region46: #{atr_conv.2} parent=35 // pred_check_branch
        %1346 = sbr.rel (%p1344) target = $region48
      $region47: #{atr_conv.2} parent=35 // pred_region
        _
      $region48: #{atr_conv.2} parent=35 // pred_fallthru
        _
      // Predicated region
      $region49: #{atr_conv.2} parent=35 // pred_check
        %p1347 = pneg %p179
      $region50: #{atr_conv.2} parent=35 // pred_check_branch
        %1349 = sbr.rel (%p1347) target = $region52
      $region51: #{atr_conv.2} parent=35 // pred_region
        _
      $region52: #{atr_conv.2} parent=35 // pred_fallthru
        _
      // Predicated region
      $region53: #{atr_conv.2} parent=35 // pred_check
        %p1350 = pneg %p153
      $region54: #{atr_conv.2} parent=35 // pred_check_branch
        %1352 = sbr.rel (%p1350) target = $region56
      $region55: #{atr_conv.2} parent=35 // pred_region
        %p1353 = scmp.lt.s32.totalorder %s21, 0
        %s1354 = scalar_select %p1353, %s21, 0
        %s1355 = smul.addr %s1354, 8
        %s1356 = scalar_lea.vmem %s4, %s1355
      $region56: #{atr_conv.2} parent=35 // pred_fallthru
        _
      // Predicated region
      $region57: #{atr_conv.2} parent=35 // pred_check
        %p1357 = pneg %p179
      $region58: #{atr_conv.2} parent=35 // pred_check_branch
        %1359 = sbr.rel (%p1357) target = $region60
      $region59: #{atr_conv.2} parent=35 // pred_region
        %p1360 = scmp.lt.s32.totalorder %s21, 0
        %s1361 = scalar_select %p1360, %s21, 0
        %s1362 = smul.addr %s1361, 8
        %s1363 = scalar_lea.vmem %s5, %s1362
      $region60: #{atr_conv.2} parent=35 // pred_fallthru
        _
    $region36: #{atr_conv.2} parent=5 // pred_fallthru
      _
    %p1364 = scmp.le.s32.totalorder 2, %s12
    // Predicated region
    $region61: #{atr_conv.2} parent=5 // pred_check
      %p1365 = pneg %p1364
    $region62: #{atr_conv.2} parent=5 // pred_check_branch
      %1367 = sbr.rel (%p1365) target = $region64
    $region63: #{atr_conv.2} parent=5 // pred_region
      %s1368 = ssub.s32 %s12, 2
    $region64: #{atr_conv.2} parent=5 // pred_fallthru
      _
  $region6: #{atr_conv.2} parent=0 // loop_footer
    %s16 = sadd.s32 1, %s12
  $region7: #{atr_conv.2} parent=0 // loop_footer_branch
    %11 = sbr.rel target = $region3
  $region8: #{atr_conv.2} parent=0 // loop_exit
    _

// kernel: atr_conv.3
$region0: #{atr_conv.3}
  #allocation0 [shape = 'u32[]', space=smem, size = 0x4, offset = 0x4, fixed_abs, tag = 'smem constant byte address 0x4 - core index']
  #allocation1 [shape = 'u32[72,128]{1,0:T(1,128)}', space=vmem, size = 0x9000, scoped, tag = 'internal scratch']
  %s0 = inlined_call_operand.vmem [shape: f32[9,8,8], index: 0, kind: input, shape index: {}]
  %s1 = inlined_call_operand.vmem [shape: f32[8,1536], index: 1, kind: input, shape index: {}, may-alias: {1,2}]
  %s2 = inlined_call_operand.vmem [shape: f32[8,1536], index: 2, kind: input, shape index: {}, may-alias: {1,2}]
  %s3 = inlined_call_operand.vmem [shape: f32[8,1], index: 3, kind: input, shape index: {}]
  %s4 = inlined_call_operand.vmem [shape: f32[8,1], index: 4, kind: input, shape index: {}]
  %s5 = inlined_call_operand.vmem [shape: f32[8,1024], index: 5, kind: output, shape index: {}]
  %s6 = sld [smem:[#allocation0]]
  $region53: #{atr_conv.3} parent=0
    _
  %s8 = ssub.s32 1, %s6
  %s9 = scalar_select 0, %s8, %s6
  loop: start=0, step=1, limit=4
  $region2: #{atr_conv.3} parent=0 // loop_pre_header
    _
  $region3: #{atr_conv.3} parent=0 // loop_header
    %s11 = sphi 0, %s15
    %p12 = scmp.ge.s32.totalorder %s11, 4
    %s18 = sphi 0, %s30
    %s19 = sphi 0, %s26
    %s20 = sphi 0, %s18
    %s21 = sphi 0, %s19
    %s22 = sphi 0, %s20
    %s23 = sphi 0, %s21
    %s33 = sphi 0, %s35
    %s36 = sphi 0, %s33
    %s37 = sphi 0, %s36
    %s53 = sphi 0, %s37
    %s59 = sphi 0, %s61
    %s62 = sphi 0, %s59
    %s63 = sphi 0, %s62
    %s79 = sphi 0, %s63
    %s87 = sphi 0, %s89
    %s90 = sphi 0, %s87
    %s91 = sphi 0, %s90
    %s107 = sphi 0, %s91
    %s113 = sphi 0, %s115
    %s116 = sphi 0, %s113
    %s117 = sphi 0, %s116
    %s133 = sphi 0, %s117
    %s139 = sphi 0, %s141
    %s142 = sphi 0, %s139
    %s143 = sphi 0, %s142
    %s159 = sphi 0, %s143
    %s167 = sphi 0, %s169
    %s170 = sphi 0, %s167
    %s171 = sphi 0, %s170
    %s187 = sphi 0, %s171
  $region4: #{atr_conv.3} parent=0 // loop_header_branch
    %14 = sbr.rel (%p12) target = $region8
  $region5: #{atr_conv.3} parent=0 // loop_body
    %s16 = ssub.s32 %s11, 1
    %s17 = ssub.s32 %s11, 2
    %s24 = sadd.s32 1, %s19
    %p25 = scmp.ge.s32.totalorder %s24, 2
    %s26 = scalar_select %p25, 0, %s24
    %s27 = sadd.s32 1, %s18
    %s28 = scalar_select %p25, %s27, %s18
    %p29 = scmp.ge.s32.totalorder %s28, 1
    %s30 = scalar_select %p29, 0, %s28
    %s31 = ssub.s32 %s18, %s30
    %p32 = scmp.eq.s32.totalorder %s31, 0
    %s34 = sadd.s32 %s33, 1
    %s35 = scalar_select %p32, %s33, %s34
    %p38 = pneg %p32
    %p39 = scmp.eq.s32.totalorder %s11, 1
    %p40 = por %p38, %p39
    %p41 = scmp.ne.s32.totalorder %s33, %s36
    %p42 = scmp.eq.s32.totalorder %s11, 0
    %p43 = por %p41, %p42
    %p44 = scmp.ne.s32.totalorder %s33, %s36
    %p45 = scmp.eq.s32.totalorder %s16, 1
    %p46 = por %p44, %p45
    %p47 = scmp.ne.s32.totalorder %s36, %s37
    %p48 = scmp.eq.s32.totalorder %s16, 0
    %p49 = por %p47, %p48
    %p50 = scmp.ne.s32.totalorder %s36, %s37
    %p51 = scmp.eq.s32.totalorder %s17, 1
    %p52 = por %p50, %p51
    %p54 = scmp.ne.s32.totalorder %s37, %s53
    %p55 = scmp.eq.s32.totalorder %s17, 0
    %p56 = por %p54, %p55
    %s57 = ssub.s32 %s19, %s26
    %p58 = scmp.eq.s32.totalorder %s57, 0
    %s60 = sadd.s32 %s59, 1
    %s61 = scalar_select %p58, %s59, %s60
    %p64 = pneg %p58
    %p65 = scmp.eq.s32.totalorder %s11, 1
    %p66 = por %p64, %p65
    %p67 = scmp.ne.s32.totalorder %s59, %s62
    %p68 = scmp.eq.s32.totalorder %s11, 0
    %p69 = por %p67, %p68
    %p70 = scmp.ne.s32.totalorder %s59, %s62
    %p71 = scmp.eq.s32.totalorder %s16, 1
    %p72 = por %p70, %p71
    %p73 = scmp.ne.s32.totalorder %s62, %s63
    %p74 = scmp.eq.s32.totalorder %s16, 0
    %p75 = por %p73, %p74
    %p76 = scmp.ne.s32.totalorder %s62, %s63
    %p77 = scmp.eq.s32.totalorder %s17, 1
    %p78 = por %p76, %p77
    %p80 = scmp.ne.s32.totalorder %s63, %s79
    %p81 = scmp.eq.s32.totalorder %s17, 0
    %p82 = por %p80, %p81
    %s83 = sadd.s32 %s19, 1
    %s84 = sadd.s32 %s26, 1
    %s85 = ssub.s32 %s83, %s84
    %p86 = scmp.eq.s32.totalorder %s85, 0
    %s88 = sadd.s32 %s87, 1
    %s89 = scalar_select %p86, %s87, %s88
    %p92 = pneg %p86
    %p93 = scmp.eq.s32.totalorder %s11, 1
    %p94 = por %p92, %p93
    %p95 = scmp.ne.s32.totalorder %s87, %s90
    %p96 = scmp.eq.s32.totalorder %s11, 0
    %p97 = por %p95, %p96
    %p98 = scmp.ne.s32.totalorder %s87, %s90
    %p99 = scmp.eq.s32.totalorder %s16, 1
    %p100 = por %p98, %p99
    %p101 = scmp.ne.s32.totalorder %s90, %s91
    %p102 = scmp.eq.s32.totalorder %s16, 0
    %p103 = por %p101, %p102
    %p104 = scmp.ne.s32.totalorder %s90, %s91
    %p105 = scmp.eq.s32.totalorder %s17, 1
    %p106 = por %p104, %p105
    %p108 = scmp.ne.s32.totalorder %s91, %s107
    %p109 = scmp.eq.s32.totalorder %s17, 0
    %p110 = por %p108, %p109
    %s111 = ssub.s32 %s18, %s30
    %p112 = scmp.eq.s32.totalorder %s111, 0
    %s114 = sadd.s32 %s113, 1
    %s115 = scalar_select %p112, %s113, %s114
    %p118 = pneg %p112
    %p119 = scmp.eq.s32.totalorder %s11, 1
    %p120 = por %p118, %p119
    %p121 = scmp.ne.s32.totalorder %s113, %s116
    %p122 = scmp.eq.s32.totalorder %s11, 0
    %p123 = por %p121, %p122
    %p124 = scmp.ne.s32.totalorder %s113, %s116
    %p125 = scmp.eq.s32.totalorder %s16, 1
    %p126 = por %p124, %p125
    %p127 = scmp.ne.s32.totalorder %s116, %s117
    %p128 = scmp.eq.s32.totalorder %s16, 0
    %p129 = por %p127, %p128
    %p130 = scmp.ne.s32.totalorder %s116, %s117
    %p131 = scmp.eq.s32.totalorder %s17, 1
    %p132 = por %p130, %p131
    %p134 = scmp.ne.s32.totalorder %s117, %s133
    %p135 = scmp.eq.s32.totalorder %s17, 0
    %p136 = por %p134, %p135
    %s137 = ssub.s32 %s18, %s30
    %p138 = scmp.eq.s32.totalorder %s137, 0
    %s140 = sadd.s32 %s139, 1
    %s141 = scalar_select %p138, %s139, %s140
    %p144 = pneg %p138
    %p145 = scmp.eq.s32.totalorder %s11, 1
    %p146 = por %p144, %p145
    %p147 = scmp.ne.s32.totalorder %s139, %s142
    %p148 = scmp.eq.s32.totalorder %s11, 0
    %p149 = por %p147, %p148
    %p150 = scmp.ne.s32.totalorder %s139, %s142
    %p151 = scmp.eq.s32.totalorder %s16, 1
    %p152 = por %p150, %p151
    %p153 = scmp.ne.s32.totalorder %s142, %s143
    %p154 = scmp.eq.s32.totalorder %s16, 0
    %p155 = por %p153, %p154
    %p156 = scmp.ne.s32.totalorder %s142, %s143
    %p157 = scmp.eq.s32.totalorder %s17, 1
    %p158 = por %p156, %p157
    %p160 = scmp.ne.s32.totalorder %s143, %s159
    %p161 = scmp.eq.s32.totalorder %s17, 0
    %p162 = por %p160, %p161
    %s163 = ssub.s32 %s18, %s30
    %s164 = ssub.s32 %s19, %s26
    %s165 = sor.u32 %s163, %s164
    %p166 = scmp.eq.s32.totalorder %s165, 0
    %s168 = sadd.s32 %s167, 1
    %s169 = scalar_select %p166, %s167, %s168
    %p172 = pneg %p166
    %p173 = scmp.eq.s32.totalorder %s11, 1
    %p174 = por %p172, %p173
    %p175 = scmp.ne.s32.totalorder %s167, %s170
    %p176 = scmp.eq.s32.totalorder %s11, 0
    %p177 = por %p175, %p176
    %p178 = scmp.ne.s32.totalorder %s167, %s170
    %p179 = scmp.eq.s32.totalorder %s16, 1
    %p180 = por %p178, %p179
    %p181 = scmp.ne.s32.totalorder %s170, %s171
    %p182 = scmp.eq.s32.totalorder %s16, 0
    %p183 = por %p181, %p182
    %p184 = scmp.ne.s32.totalorder %s170, %s171
    %p185 = scmp.eq.s32.totalorder %s17, 1
    %p186 = por %p184, %p185
    %p188 = scmp.ne.s32.totalorder %s171, %s187
    %p189 = scmp.eq.s32.totalorder %s17, 0
    %p190 = por %p188, %p189
    %p191 = scmp.le.s32.totalorder 1, %s11
    %p192 = scmp.lt.s32.totalorder %s11, 3
    %p193 = pnand %p191, %p192
    %p194 = pneg %p193
    // Predicated region
    $region9: #{atr_conv.3} parent=5 // pred_check
      _
    $region10: #{atr_conv.3} parent=5 // pred_check_branch
      %196 = sbr.rel (%p193) target = $region12
    $region11: #{atr_conv.3} parent=5 // pred_region
      %s197 = ssub.s32 %s11, 1
      // Predicated region
      $region13: #{atr_conv.3} parent=11 // pred_check
        %p198 = pneg %p49
      $region14: #{atr_conv.3} parent=11 // pred_check_branch
        %200 = sbr.rel (%p198) target = $region16
      $region15: #{atr_conv.3} parent=11 // pred_region
        %p201 = scmp.lt.s32.totalorder %s20, 0
        %s202 = scalar_select %p201, %s20, 0
        %s203 = smul.addr %s202, 8
        %s204 = scalar_lea.vmem %s0, %s203
      $region16: #{atr_conv.3} parent=11 // pred_fallthru
        _
      // Predicated region
      $region17: #{atr_conv.3} parent=11 // pred_check
        %p205 = pneg %p129
      $region18: #{atr_conv.3} parent=11 // pred_check_branch
        %207 = sbr.rel (%p205) target = $region20
      $region19: #{atr_conv.3} parent=11 // pred_region
        %p208 = scmp.lt.s32.totalorder %s20, 0
        %s209 = scalar_select %p208, %s20, 0
        %s210 = smul.addr %s209, 8
        %s211 = scalar_lea.vmem %s3, %s210
      $region20: #{atr_conv.3} parent=11 // pred_fallthru
        _
      // Predicated region
      $region21: #{atr_conv.3} parent=11 // pred_check
        %p212 = pneg %p155
      $region22: #{atr_conv.3} parent=11 // pred_check_branch
        %214 = sbr.rel (%p212) target = $region24
      $region23: #{atr_conv.3} parent=11 // pred_region
        %p215 = scmp.lt.s32.totalorder %s20, 0
        %s216 = scalar_select %p215, %s20, 0
        %s217 = smul.addr %s216, 8
        %s218 = scalar_lea.vmem %s4, %s217
      $region24: #{atr_conv.3} parent=11 // pred_fallthru
        _
    $region12: #{atr_conv.3} parent=5 // pred_fallthru
      _
    %p219 = scmp.lt.s32.totalorder %s11, 2
    // Predicated region
    $region25: #{atr_conv.3} parent=5 // pred_check
      %p220 = pneg %p219
    $region26: #{atr_conv.3} parent=5 // pred_check_branch
      %222 = sbr.rel (%p220) target = $region28
    $region27: #{atr_conv.3} parent=5 // pred_region
      // Predicated region
      $region29: #{atr_conv.3} parent=27 // pred_check
        %p223 = pneg %p69
      $region30: #{atr_conv.3} parent=27 // pred_check_branch
        %225 = sbr.rel (%p223) target = $region32
      $region31: #{atr_conv.3} parent=27 // pred_region
        %s226 = smul.u32 4, %s19
        %p227 = scmp.lt.s32.totalorder %s226, 11
        %s228 = scalar_select %p227, %s226, 11
        %s229 = smul.addr %s228, 8
        %s230 = scalar_lea.vmem %s1, %s229
        %s231 = smul.u32 4, %s19
      $region32: #{atr_conv.3} parent=27 // pred_fallthru
        _
      // Predicated region
      $region33: #{atr_conv.3} parent=27 // pred_check
        %p232 = pneg %p97
      $region34: #{atr_conv.3} parent=27 // pred_check_branch
        %234 = sbr.rel (%p232) target = $region36
      $region35: #{atr_conv.3} parent=27 // pred_region
        %s235 = sadd.s32 %s19, 1
        %s236 = smul.u32 4, %s235
        %p237 = scmp.lt.s32.totalorder %s236, 11
        %s238 = scalar_select %p237, %s236, 11
        %s239 = smul.addr %s238, 8
        %s240 = scalar_lea.vmem %s2, %s239
        %s241 = sadd.s32 %s19, 1
        %s242 = smul.u32 4, %s241
      $region36: #{atr_conv.3} parent=27 // pred_fallthru
        _
    $region28: #{atr_conv.3} parent=5 // pred_fallthru
      _
    %p243 = scmp.le.s32.totalorder 1, %s11
    %p244 = scmp.lt.s32.totalorder %s11, 3
    %p245 = pnand %p243, %p244
    %p246 = pneg %p245
    // Predicated region
    $region37: #{atr_conv.3} parent=5 // pred_check
      _
    $region38: #{atr_conv.3} parent=5 // pred_check_branch
      %248 = sbr.rel (%p245) target = $region40
    $region39: #{atr_conv.3} parent=5 // pred_region
      %s249 = ssub.s32 %s11, 1
      %p250 = scmp.lt.s32.totalorder %s20, 0
      %s251 = scalar_select %p250, %s20, 0
      %s252 = smul.addr %s251, 8
      %s253 = scalar_lea.vmem %s0, %s252
      %p254 = pneg %p49
      %p255 = pneg %p46
      %s256 = smul.u32 4, %s21
      %p257 = scmp.lt.s32.totalorder %s256, 11
      %s258 = scalar_select %p257, %s256, 11
      %s259 = smul.addr %s258, 8
      %s260 = scalar_lea.vmem %s1, %s259
      %p261 = pneg %p75
      %p262 = pneg %p72
      %s263 = sadd.s32 %s21, 1
      %s264 = smul.u32 4, %s263
      %p265 = scmp.lt.s32.totalorder %s264, 11
      %s266 = scalar_select %p265, %s264, 11
      %s267 = smul.addr %s266, 8
      %s268 = scalar_lea.vmem %s2, %s267
      %p269 = pneg %p103
      %p270 = pneg %p100
      %p271 = scmp.lt.s32.totalorder %s20, 0
      %s272 = scalar_select %p271, %s20, 0
      %s273 = smul.addr %s272, 8
      %s274 = scalar_lea.vmem %s3, %s273
      %p275 = pneg %p129
      %p276 = pneg %p126
      %p277 = scmp.lt.s32.totalorder %s20, 0
      %s278 = scalar_select %p277, %s20, 0
      %s279 = smul.addr %s278, 8
      %s280 = scalar_lea.vmem %s4, %s279
      %p281 = pneg %p155
      %p282 = pneg %p152
      %p283 = pneg %p183
      %p284 = pneg %p180
      %s285 = smul.u32 4, %s21
      %p286 = scmp.lt.s32.totalorder %s20, 0
      %s287 = scalar_select %p286, %s20, 0
      %p288 = scmp.lt.s32.totalorder %s285, 7
      %s289 = scalar_select %p288, %s285, 7
      %s290 = smul.addr %s287, 8
      %s291 = sadd.s32 %s289, %s290
      %s292 = smul.addr %s291, 8
      %s293 = scalar_lea.vmem %s5, %s292
      %p294 = scmp.lt.s32.totalorder %s20, 0
      %s295 = scalar_select %p294, %s20, 0
      %s296 = smul.addr %s295, 8
      %s297 = scalar_lea.vmem %s0, %s296
      %s298 = smul.u32 4, %s21
      %p299 = scmp.lt.s32.totalorder %s298, 11
      %s300 = scalar_select %p299, %s298, 11
      %s301 = smul.addr %s300, 8
      %s302 = scalar_lea.vmem %s1, %s301
      %s303 = smul.u32 4, %s21
      %s304 = sadd.s32 %s21, 1
      %s305 = smul.u32 4, %s304
      %p306 = scmp.lt.s32.totalorder %s305, 11
      %s307 = scalar_select %p306, %s305, 11
      %s308 = smul.addr %s307, 8
      %s309 = scalar_lea.vmem %s2, %s308
      %s310 = sadd.s32 %s21, 1
      %s311 = smul.u32 4, %s310
      %p312 = scmp.lt.s32.totalorder %s20, 0
      %s313 = scalar_select %p312, %s20, 0
      %s314 = smul.addr %s313, 8
      %s315 = scalar_lea.vmem %s3, %s314
      %p316 = scmp.lt.s32.totalorder %s20, 0
      %s317 = scalar_select %p316, %s20, 0
      %s318 = smul.addr %s317, 8
      %s319 = scalar_lea.vmem %s4, %s318
      %s320 = smul.u32 4, %s21
      %p321 = scmp.lt.s32.totalorder %s20, 0
      %s322 = scalar_select %p321, %s20, 0
      %p323 = scmp.lt.s32.totalorder %s320, 7
      %s324 = scalar_select %p323, %s320, 7
      %s325 = smul.addr %s322, 8
      %s326 = sadd.s32 %s324, %s325
      %s327 = smul.addr %s326, 8
      %s328 = scalar_lea.vmem %s5, %s327
      %s329 = smul.u32 4, %s21
      %v330 = vld [vmem:[%s302] sm:$0xff]
      %v331 = vld [vmem:[%s302 + $0x8] sm:$0xff]
      %v332 = vld [vmem:[%s302 + $0x10] sm:$0xff]
      %v333 = vld [vmem:[%s302 + $0x18] sm:$0xff]
      %v334 = vld [vmem:[%s309] sm:$0xff]
      %v335 = vld [vmem:[%s297] sm:$0xff]
      %s336 = scalar_lea.vmem %s297, 8
      %v337 = vld [vmem:[%s336] sm:$0xff]
      %343 = vrot.lane.b32.xlu0 %v330, 126
      %v344 = vpop.permute.xlu0 %343
      %345 = vrot.lane.b32.xlu0 %v331, 126
      %v346 = vpop.permute.xlu0 %345
      %347 = vrot.lane.b32.xlu0 %v332, 126
      %v348 = vpop.permute.xlu0 %347
      %349 = vrot.lane.b32.xlu0 %v333, 126
      %v350 = vpop.permute.xlu0 %349
      %351 = vrot.lane.b32.xlu0 %v334, 126
      %v352 = vpop.permute.xlu0 %351
      %vm353 = vcmask 1031168
      %v354 = vsel %vm353, %v344, %v346
      %v355 = vsel %vm353, %v346, %v348
      %v356 = vsel %vm353, %v348, %v350
      %v357 = vsel %vm353, %v350, %v352
      %vm362 = vcmask 64512
      %v364 = vsel %vm362, %v337, 0
      %366 = vmatpush.msra.mxu0 0.0
      %367 = vmatpush.msra.mxu0 0.0
      %368 = vmatpush.msra.mxu0 0.0
      %369 = vmatpush.msra.mxu0 0.0
      %370 = vmatpush.msra.mxu0 0.0
      %371 = vmatpush.msra.mxu0 0.0
      %372 = vmatpush.msra.mxu0 0.0
      %373 = vmatpush.msra.mxu0 0.0
      %374 = vmatpush.msra.mxu0 0.0
      %375 = vmatpush.msra.mxu0 0.0
      %376 = vmatpush.msra.mxu0 0.0
      %377 = vmatpush.msra.mxu0 0.0
      %378 = vmatpush.msra.mxu0 0.0
      %379 = vmatpush.msra.mxu0 0.0
      %380 = vmatpush.msra.mxu0 0.0
      %381 = vmatpush.msra.mxu0 %v354
      %382 = vmatmul.f32.gmra.mxu0 %v364
      %v383 = vpop.f32.mrf.mxu0
      %v384 = vadd.f32 0.0, %v383
      %385 = vdwg.mxu0
      %386 = vmatpush.msra.mxu0 0.0
      %387 = vmatpush.msra.mxu0 0.0
      %388 = vmatpush.msra.mxu0 0.0
      %389 = vmatpush.msra.mxu0 0.0
      %390 = vmatpush.msra.mxu0 0.0
      %391 = vmatpush.msra.mxu0 0.0
      %392 = vmatpush.msra.mxu0 0.0
      %393 = vmatpush.msra.mxu0 0.0
      %394 = vmatpush.msra.mxu0 0.0
      %395 = vmatpush.msra.mxu0 0.0
      %396 = vmatpush.msra.mxu0 0.0
      %397 = vmatpush.msra.mxu0 0.0
      %398 = vmatpush.msra.mxu0 0.0
      %399 = vmatpush.msra.mxu0 0.0
      %400 = vmatpush.msra.mxu0 0.0
      %401 = vmatpush.msra.mxu0 %v355
      %402 = vmatmul.f32.gmra.mxu0 %v364
      %v403 = vpop.f32.mrf.mxu0
      %v404 = vadd.f32 0.0, %v403
      %405 = vdwg.mxu0
      %406 = vmatpush.msra.mxu0 0.0
      %407 = vmatpush.msra.mxu0 0.0
      %408 = vmatpush.msra.mxu0 0.0
      %409 = vmatpush.msra.mxu0 0.0
      %410 = vmatpush.msra.mxu0 0.0
      %411 = vmatpush.msra.mxu0 0.0
      %412 = vmatpush.msra.mxu0 0.0
      %413 = vmatpush.msra.mxu0 0.0
      %414 = vmatpush.msra.mxu0 0.0
      %415 = vmatpush.msra.mxu0 0.0
      %416 = vmatpush.msra.mxu0 0.0
      %417 = vmatpush.msra.mxu0 0.0
      %418 = vmatpush.msra.mxu0 0.0
      %419 = vmatpush.msra.mxu0 0.0
      %420 = vmatpush.msra.mxu0 0.0
      %421 = vmatpush.msra.mxu0 %v356
      %422 = vmatmul.f32.gmra.mxu0 %v364
      %v423 = vpop.f32.mrf.mxu0
      %v424 = vadd.f32 0.0, %v423
      %425 = vdwg.mxu0
      %426 = vmatpush.msra.mxu0 0.0
      %427 = vmatpush.msra.mxu0 0.0
      %428 = vmatpush.msra.mxu0 0.0
      %429 = vmatpush.msra.mxu0 0.0
      %430 = vmatpush.msra.mxu0 0.0
      %431 = vmatpush.msra.mxu0 0.0
      %432 = vmatpush.msra.mxu0 0.0
      %433 = vmatpush.msra.mxu0 0.0
      %434 = vmatpush.msra.mxu0 0.0
      %435 = vmatpush.msra.mxu0 0.0
      %436 = vmatpush.msra.mxu0 0.0
      %437 = vmatpush.msra.mxu0 0.0
      %438 = vmatpush.msra.mxu0 0.0
      %439 = vmatpush.msra.mxu0 0.0
      %440 = vmatpush.msra.mxu0 0.0
      %441 = vmatpush.msra.mxu0 %v357
      %442 = vmatmul.f32.gmra.mxu0 %v364
      %v443 = vpop.f32.mrf.mxu0
      %v444 = vadd.f32 0.0, %v443
      %445 = vdwg.mxu0
      %v447 = vsel %vm362, %v335, 0
      %449 = vmatpush.msra.mxu0 0.0
      %450 = vmatpush.msra.mxu0 0.0
      %451 = vmatpush.msra.mxu0 0.0
      %452 = vmatpush.msra.mxu0 0.0
      %453 = vmatpush.msra.mxu0 0.0
      %454 = vmatpush.msra.mxu0 0.0
      %455 = vmatpush.msra.mxu0 0.0
      %456 = vmatpush.msra.mxu0 0.0
      %457 = vmatpush.msra.mxu0 0.0
      %458 = vmatpush.msra.mxu0 0.0
      %459 = vmatpush.msra.mxu0 0.0
      %460 = vmatpush.msra.mxu0 0.0
      %461 = vmatpush.msra.mxu0 0.0
      %462 = vmatpush.msra.mxu0 0.0
      %463 = vmatpush.msra.mxu0 0.0
      %464 = vmatpush.msra.mxu0 %v330
      %465 = vmatmul.f32.gmra.mxu0 %v447
      %v466 = vpop.f32.mrf.mxu0
      %v467 = vadd.f32 %v384, %v466
      %468 = vdwg.mxu0
      %469 = vmatpush.msra.mxu0 0.0
      %470 = vmatpush.msra.mxu0 0.0
      %471 = vmatpush.msra.mxu0 0.0
      %472 = vmatpush.msra.mxu0 0.0
      %473 = vmatpush.msra.mxu0 0.0
      %474 = vmatpush.msra.mxu0 0.0
      %475 = vmatpush.msra.mxu0 0.0
      %476 = vmatpush.msra.mxu0 0.0
      %477 = vmatpush.msra.mxu0 0.0
      %478 = vmatpush.msra.mxu0 0.0
      %479 = vmatpush.msra.mxu0 0.0
      %480 = vmatpush.msra.mxu0 0.0
      %481 = vmatpush.msra.mxu0 0.0
      %482 = vmatpush.msra.mxu0 0.0
      %483 = vmatpush.msra.mxu0 0.0
      %484 = vmatpush.msra.mxu0 %v331
      %485 = vmatmul.f32.gmra.mxu0 %v447
      %v486 = vpop.f32.mrf.mxu0
      %v487 = vadd.f32 %v404, %v486
      %488 = vdwg.mxu0
      %489 = vmatpush.msra.mxu0 0.0
      %490 = vmatpush.msra.mxu0 0.0
      %491 = vmatpush.msra.mxu0 0.0
      %492 = vmatpush.msra.mxu0 0.0
      %493 = vmatpush.msra.mxu0 0.0
      %494 = vmatpush.msra.mxu0 0.0
      %495 = vmatpush.msra.mxu0 0.0
      %496 = vmatpush.msra.mxu0 0.0
      %497 = vmatpush.msra.mxu0 0.0
      %498 = vmatpush.msra.mxu0 0.0
      %499 = vmatpush.msra.mxu0 0.0
      %500 = vmatpush.msra.mxu0 0.0
      %501 = vmatpush.msra.mxu0 0.0
      %502 = vmatpush.msra.mxu0 0.0
      %503 = vmatpush.msra.mxu0 0.0
      %504 = vmatpush.msra.mxu0 %v332
      %505 = vmatmul.f32.gmra.mxu0 %v447
      %v506 = vpop.f32.mrf.mxu0
      %v507 = vadd.f32 %v424, %v506
      %508 = vdwg.mxu0
      %509 = vmatpush.msra.mxu0 0.0
      %510 = vmatpush.msra.mxu0 0.0
      %511 = vmatpush.msra.mxu0 0.0
      %512 = vmatpush.msra.mxu0 0.0
      %513 = vmatpush.msra.mxu0 0.0
      %514 = vmatpush.msra.mxu0 0.0
      %515 = vmatpush.msra.mxu0 0.0
      %516 = vmatpush.msra.mxu0 0.0
      %517 = vmatpush.msra.mxu0 0.0
      %518 = vmatpush.msra.mxu0 0.0
      %519 = vmatpush.msra.mxu0 0.0
      %520 = vmatpush.msra.mxu0 0.0
      %521 = vmatpush.msra.mxu0 0.0
      %522 = vmatpush.msra.mxu0 0.0
      %523 = vmatpush.msra.mxu0 0.0
      %524 = vmatpush.msra.mxu0 %v333
      %525 = vmatmul.f32.gmra.mxu0 %v447
      %v526 = vpop.f32.mrf.mxu0
      %v527 = vadd.f32 %v444, %v526
      %528 = vdwg.mxu0
      %s529 = scalar_lea.vmem %s297, 16
      %v530 = vld [vmem:[%s529] sm:$0xff]
      %531 = vrot.lane.b32.xlu0 %v330, 124
      %v532 = vpop.permute.xlu0 %531
      %533 = vrot.lane.b32.xlu0 %v331, 124
      %v534 = vpop.permute.xlu0 %533
      %535 = vrot.lane.b32.xlu0 %v332, 124
      %v536 = vpop.permute.xlu0 %535
      %537 = vrot.lane.b32.xlu0 %v333, 124
      %v538 = vpop.permute.xlu0 %537
      %539 = vrot.lane.b32.xlu0 %v334, 124
      %v540 = vpop.permute.xlu0 %539
      %vm541 = vcmask 1014784
      %v542 = vsel %vm541, %v532, %v534
      %v543 = vsel %vm541, %v534, %v536
      %v544 = vsel %vm541, %v536, %v538
      %v545 = vsel %vm541, %v538, %v540
      %v551 = vsel %vm362, %v530, 0
      %553 = vmatpush.msra.mxu0 0.0
      %554 = vmatpush.msra.mxu0 0.0
      %555 = vmatpush.msra.mxu0 0.0
      %556 = vmatpush.msra.mxu0 0.0
      %557 = vmatpush.msra.mxu0 0.0
      %558 = vmatpush.msra.mxu0 0.0
      %559 = vmatpush.msra.mxu0 0.0
      %560 = vmatpush.msra.mxu0 0.0
      %561 = vmatpush.msra.mxu0 0.0
      %562 = vmatpush.msra.mxu0 0.0
      %563 = vmatpush.msra.mxu0 0.0
      %564 = vmatpush.msra.mxu0 0.0
      %565 = vmatpush.msra.mxu0 0.0
      %566 = vmatpush.msra.mxu0 0.0
      %567 = vmatpush.msra.mxu0 0.0
      %568 = vmatpush.msra.mxu0 %v542
      %569 = vmatmul.f32.gmra.mxu0 %v551
      %v570 = vpop.f32.mrf.mxu0
      %v571 = vadd.f32 0.0, %v570
      %572 = vdwg.mxu0
      %573 = vmatpush.msra.mxu0 0.0
      %574 = vmatpush.msra.mxu0 0.0
      %575 = vmatpush.msra.mxu0 0.0
      %576 = vmatpush.msra.mxu0 0.0
      %577 = vmatpush.msra.mxu0 0.0
      %578 = vmatpush.msra.mxu0 0.0
      %579 = vmatpush.msra.mxu0 0.0
      %580 = vmatpush.msra.mxu0 0.0
      %581 = vmatpush.msra.mxu0 0.0
      %582 = vmatpush.msra.mxu0 0.0
      %583 = vmatpush.msra.mxu0 0.0
      %584 = vmatpush.msra.mxu0 0.0
      %585 = vmatpush.msra.mxu0 0.0
      %586 = vmatpush.msra.mxu0 0.0
      %587 = vmatpush.msra.mxu0 0.0
      %588 = vmatpush.msra.mxu0 %v543
      %589 = vmatmul.f32.gmra.mxu0 %v551
      %v590 = vpop.f32.mrf.mxu0
      %v591 = vadd.f32 0.0, %v590
      %592 = vdwg.mxu0
      %593 = vmatpush.msra.mxu0 0.0
      %594 = vmatpush.msra.mxu0 0.0
      %595 = vmatpush.msra.mxu0 0.0
      %596 = vmatpush.msra.mxu0 0.0
      %597 = vmatpush.msra.mxu0 0.0
      %598 = vmatpush.msra.mxu0 0.0
      %599 = vmatpush.msra.mxu0 0.0
      %600 = vmatpush.msra.mxu0 0.0
      %601 = vmatpush.msra.mxu0 0.0
      %602 = vmatpush.msra.mxu0 0.0
      %603 = vmatpush.msra.mxu0 0.0
      %604 = vmatpush.msra.mxu0 0.0
      %605 = vmatpush.msra.mxu0 0.0
      %606 = vmatpush.msra.mxu0 0.0
      %607 = vmatpush.msra.mxu0 0.0
      %608 = vmatpush.msra.mxu0 %v544
      %609 = vmatmul.f32.gmra.mxu0 %v551
      %v610 = vpop.f32.mrf.mxu0
      %v611 = vadd.f32 0.0, %v610
      %612 = vdwg.mxu0
      %613 = vmatpush.msra.mxu0 0.0
      %614 = vmatpush.msra.mxu0 0.0
      %615 = vmatpush.msra.mxu0 0.0
      %616 = vmatpush.msra.mxu0 0.0
      %617 = vmatpush.msra.mxu0 0.0
      %618 = vmatpush.msra.mxu0 0.0
      %619 = vmatpush.msra.mxu0 0.0
      %620 = vmatpush.msra.mxu0 0.0
      %621 = vmatpush.msra.mxu0 0.0
      %622 = vmatpush.msra.mxu0 0.0
      %623 = vmatpush.msra.mxu0 0.0
      %624 = vmatpush.msra.mxu0 0.0
      %625 = vmatpush.msra.mxu0 0.0
      %626 = vmatpush.msra.mxu0 0.0
      %627 = vmatpush.msra.mxu0 0.0
      %628 = vmatpush.msra.mxu0 %v545
      %629 = vmatmul.f32.gmra.mxu0 %v551
      %v630 = vpop.f32.mrf.mxu0
      %v631 = vadd.f32 0.0, %v630
      %632 = vdwg.mxu0
      %v633 = vadd.f32 %v467, %v571
      %v634 = vadd.f32 %v487, %v591
      %v635 = vadd.f32 %v507, %v611
      %v636 = vadd.f32 %v527, %v631
      %s637 = scalar_lea.vmem %s297, 24
      %v638 = vld [vmem:[%s637] sm:$0xff]
      %639 = vrot.lane.b32.xlu0 %v330, 88
      %v640 = vpop.permute.xlu0 %639
      %641 = vrot.lane.b32.xlu0 %v331, 88
      %v642 = vpop.permute.xlu0 %641
      %643 = vrot.lane.b32.xlu0 %v332, 88
      %v644 = vpop.permute.xlu0 %643
      %645 = vrot.lane.b32.xlu0 %v333, 88
      %v646 = vpop.permute.xlu0 %645
      %647 = vrot.lane.b32.xlu0 %v334, 88
      %v648 = vpop.permute.xlu0 %647
      %vm649 = vcmask 719872
      %v650 = vsel %vm649, %v640, %v642
      %v651 = vsel %vm649, %v642, %v644
      %v652 = vsel %vm649, %v644, %v646
      %v653 = vsel %vm649, %v646, %v648
      %v659 = vsel %vm362, %v638, 0
      %661 = vmatpush.msra.mxu0 0.0
      %662 = vmatpush.msra.mxu0 0.0
      %663 = vmatpush.msra.mxu0 0.0
      %664 = vmatpush.msra.mxu0 0.0
      %665 = vmatpush.msra.mxu0 0.0
      %666 = vmatpush.msra.mxu0 0.0
      %667 = vmatpush.msra.mxu0 0.0
      %668 = vmatpush.msra.mxu0 0.0
      %669 = vmatpush.msra.mxu0 0.0
      %670 = vmatpush.msra.mxu0 0.0
      %671 = vmatpush.msra.mxu0 0.0
      %672 = vmatpush.msra.mxu0 0.0
      %673 = vmatpush.msra.mxu0 0.0
      %674 = vmatpush.msra.mxu0 0.0
      %675 = vmatpush.msra.mxu0 0.0
      %676 = vmatpush.msra.mxu0 %v650
      %677 = vmatmul.f32.gmra.mxu0 %v659
      %v678 = vpop.f32.mrf.mxu0
      %v679 = vadd.f32 0.0, %v678
      %680 = vdwg.mxu0
      %681 = vmatpush.msra.mxu0 0.0
      %682 = vmatpush.msra.mxu0 0.0
      %683 = vmatpush.msra.mxu0 0.0
      %684 = vmatpush.msra.mxu0 0.0
      %685 = vmatpush.msra.mxu0 0.0
      %686 = vmatpush.msra.mxu0 0.0
      %687 = vmatpush.msra.mxu0 0.0
      %688 = vmatpush.msra.mxu0 0.0
      %689 = vmatpush.msra.mxu0 0.0
      %690 = vmatpush.msra.mxu0 0.0
      %691 = vmatpush.msra.mxu0 0.0
      %692 = vmatpush.msra.mxu0 0.0
      %693 = vmatpush.msra.mxu0 0.0
      %694 = vmatpush.msra.mxu0 0.0
      %695 = vmatpush.msra.mxu0 0.0
      %696 = vmatpush.msra.mxu0 %v651
      %697 = vmatmul.f32.gmra.mxu0 %v659
      %v698 = vpop.f32.mrf.mxu0
      %v699 = vadd.f32 0.0, %v698
      %700 = vdwg.mxu0
      %701 = vmatpush.msra.mxu0 0.0
      %702 = vmatpush.msra.mxu0 0.0
      %703 = vmatpush.msra.mxu0 0.0
      %704 = vmatpush.msra.mxu0 0.0
      %705 = vmatpush.msra.mxu0 0.0
      %706 = vmatpush.msra.mxu0 0.0
      %707 = vmatpush.msra.mxu0 0.0
      %708 = vmatpush.msra.mxu0 0.0
      %709 = vmatpush.msra.mxu0 0.0
      %710 = vmatpush.msra.mxu0 0.0
      %711 = vmatpush.msra.mxu0 0.0
      %712 = vmatpush.msra.mxu0 0.0
      %713 = vmatpush.msra.mxu0 0.0
      %714 = vmatpush.msra.mxu0 0.0
      %715 = vmatpush.msra.mxu0 0.0
      %716 = vmatpush.msra.mxu0 %v652
      %717 = vmatmul.f32.gmra.mxu0 %v659
      %v718 = vpop.f32.mrf.mxu0
      %v719 = vadd.f32 0.0, %v718
      %720 = vdwg.mxu0
      %721 = vmatpush.msra.mxu0 0.0
      %722 = vmatpush.msra.mxu0 0.0
      %723 = vmatpush.msra.mxu0 0.0
      %724 = vmatpush.msra.mxu0 0.0
      %725 = vmatpush.msra.mxu0 0.0
      %726 = vmatpush.msra.mxu0 0.0
      %727 = vmatpush.msra.mxu0 0.0
      %728 = vmatpush.msra.mxu0 0.0
      %729 = vmatpush.msra.mxu0 0.0
      %730 = vmatpush.msra.mxu0 0.0
      %731 = vmatpush.msra.mxu0 0.0
      %732 = vmatpush.msra.mxu0 0.0
      %733 = vmatpush.msra.mxu0 0.0
      %734 = vmatpush.msra.mxu0 0.0
      %735 = vmatpush.msra.mxu0 0.0
      %736 = vmatpush.msra.mxu0 %v653
      %737 = vmatmul.f32.gmra.mxu0 %v659
      %v738 = vpop.f32.mrf.mxu0
      %v739 = vadd.f32 0.0, %v738
      %740 = vdwg.mxu0
      %v741 = vadd.f32 %v633, %v679
      %v742 = vadd.f32 %v634, %v699
      %v743 = vadd.f32 %v635, %v719
      %v744 = vadd.f32 %v636, %v739
      %s745 = scalar_lea.vmem %s297, 32
      %v746 = vld [vmem:[%s745] sm:$0xff]
      %747 = vrot.lane.b32.xlu0 %v330, 86
      %v748 = vpop.permute.xlu0 %747
      %749 = vrot.lane.b32.xlu0 %v331, 86
      %v750 = vpop.permute.xlu0 %749
      %751 = vrot.lane.b32.xlu0 %v332, 86
      %v752 = vpop.permute.xlu0 %751
      %753 = vrot.lane.b32.xlu0 %v333, 86
      %v754 = vpop.permute.xlu0 %753
      %755 = vrot.lane.b32.xlu0 %v334, 86
      %v756 = vpop.permute.xlu0 %755
      %vm757 = vcmask 703488
      %v758 = vsel %vm757, %v748, %v750
      %v759 = vsel %vm757, %v750, %v752
      %v760 = vsel %vm757, %v752, %v754
      %v761 = vsel %vm757, %v754, %v756
      %v767 = vsel %vm362, %v746, 0
      %769 = vmatpush.msra.mxu0 0.0
      %770 = vmatpush.msra.mxu0 0.0
      %771 = vmatpush.msra.mxu0 0.0
      %772 = vmatpush.msra.mxu0 0.0
      %773 = vmatpush.msra.mxu0 0.0
      %774 = vmatpush.msra.mxu0 0.0
      %775 = vmatpush.msra.mxu0 0.0
      %776 = vmatpush.msra.mxu0 0.0
      %777 = vmatpush.msra.mxu0 0.0
      %778 = vmatpush.msra.mxu0 0.0
      %779 = vmatpush.msra.mxu0 0.0
      %780 = vmatpush.msra.mxu0 0.0
      %781 = vmatpush.msra.mxu0 0.0
      %782 = vmatpush.msra.mxu0 0.0
      %783 = vmatpush.msra.mxu0 0.0
      %784 = vmatpush.msra.mxu0 %v758
      %785 = vmatmul.f32.gmra.mxu0 %v767
      %v786 = vpop.f32.mrf.mxu0
      %v787 = vadd.f32 0.0, %v786
      %788 = vdwg.mxu0
      %789 = vmatpush.msra.mxu0 0.0
      %790 = vmatpush.msra.mxu0 0.0
      %791 = vmatpush.msra.mxu0 0.0
      %792 = vmatpush.msra.mxu0 0.0
      %793 = vmatpush.msra.mxu0 0.0
      %794 = vmatpush.msra.mxu0 0.0
      %795 = vmatpush.msra.mxu0 0.0
      %796 = vmatpush.msra.mxu0 0.0
      %797 = vmatpush.msra.mxu0 0.0
      %798 = vmatpush.msra.mxu0 0.0
      %799 = vmatpush.msra.mxu0 0.0
      %800 = vmatpush.msra.mxu0 0.0
      %801 = vmatpush.msra.mxu0 0.0
      %802 = vmatpush.msra.mxu0 0.0
      %803 = vmatpush.msra.mxu0 0.0
      %804 = vmatpush.msra.mxu0 %v759
      %805 = vmatmul.f32.gmra.mxu0 %v767
      %v806 = vpop.f32.mrf.mxu0
      %v807 = vadd.f32 0.0, %v806
      %808 = vdwg.mxu0
      %809 = vmatpush.msra.mxu0 0.0
      %810 = vmatpush.msra.mxu0 0.0
      %811 = vmatpush.msra.mxu0 0.0
      %812 = vmatpush.msra.mxu0 0.0
      %813 = vmatpush.msra.mxu0 0.0
      %814 = vmatpush.msra.mxu0 0.0
      %815 = vmatpush.msra.mxu0 0.0
      %816 = vmatpush.msra.mxu0 0.0
      %817 = vmatpush.msra.mxu0 0.0
      %818 = vmatpush.msra.mxu0 0.0
      %819 = vmatpush.msra.mxu0 0.0
      %820 = vmatpush.msra.mxu0 0.0
      %821 = vmatpush.msra.mxu0 0.0
      %822 = vmatpush.msra.mxu0 0.0
      %823 = vmatpush.msra.mxu0 0.0
      %824 = vmatpush.msra.mxu0 %v760
      %825 = vmatmul.f32.gmra.mxu0 %v767
      %v826 = vpop.f32.mrf.mxu0
      %v827 = vadd.f32 0.0, %v826
      %828 = vdwg.mxu0
      %829 = vmatpush.msra.mxu0 0.0
      %830 = vmatpush.msra.mxu0 0.0
      %831 = vmatpush.msra.mxu0 0.0
      %832 = vmatpush.msra.mxu0 0.0
      %833 = vmatpush.msra.mxu0 0.0
      %834 = vmatpush.msra.mxu0 0.0
      %835 = vmatpush.msra.mxu0 0.0
      %836 = vmatpush.msra.mxu0 0.0
      %837 = vmatpush.msra.mxu0 0.0
      %838 = vmatpush.msra.mxu0 0.0
      %839 = vmatpush.msra.mxu0 0.0
      %840 = vmatpush.msra.mxu0 0.0
      %841 = vmatpush.msra.mxu0 0.0
      %842 = vmatpush.msra.mxu0 0.0
      %843 = vmatpush.msra.mxu0 0.0
      %844 = vmatpush.msra.mxu0 %v761
      %845 = vmatmul.f32.gmra.mxu0 %v767
      %v846 = vpop.f32.mrf.mxu0
      %v847 = vadd.f32 0.0, %v846
      %848 = vdwg.mxu0
      %v849 = vadd.f32 %v741, %v787
      %v850 = vadd.f32 %v742, %v807
      %v851 = vadd.f32 %v743, %v827
      %v852 = vadd.f32 %v744, %v847
      %s853 = scalar_lea.vmem %s297, 40
      %v854 = vld [vmem:[%s853] sm:$0xff]
      %855 = vrot.lane.b32.xlu0 %v330, 84
      %v856 = vpop.permute.xlu0 %855
      %857 = vrot.lane.b32.xlu0 %v331, 84
      %v858 = vpop.permute.xlu0 %857
      %859 = vrot.lane.b32.xlu0 %v332, 84
      %v860 = vpop.permute.xlu0 %859
      %861 = vrot.lane.b32.xlu0 %v333, 84
      %v862 = vpop.permute.xlu0 %861
      %863 = vrot.lane.b32.xlu0 %v334, 84
      %v864 = vpop.permute.xlu0 %863
      %vm865 = vcmask 687104
      %v866 = vsel %vm865, %v856, %v858
      %v867 = vsel %vm865, %v858, %v860
      %v868 = vsel %vm865, %v860, %v862
      %v869 = vsel %vm865, %v862, %v864
      %v875 = vsel %vm362, %v854, 0
      %877 = vmatpush.msra.mxu0 0.0
      %878 = vmatpush.msra.mxu0 0.0
      %879 = vmatpush.msra.mxu0 0.0
      %880 = vmatpush.msra.mxu0 0.0
      %881 = vmatpush.msra.mxu0 0.0
      %882 = vmatpush.msra.mxu0 0.0
      %883 = vmatpush.msra.mxu0 0.0
      %884 = vmatpush.msra.mxu0 0.0
      %885 = vmatpush.msra.mxu0 0.0
      %886 = vmatpush.msra.mxu0 0.0
      %887 = vmatpush.msra.mxu0 0.0
      %888 = vmatpush.msra.mxu0 0.0
      %889 = vmatpush.msra.mxu0 0.0
      %890 = vmatpush.msra.mxu0 0.0
      %891 = vmatpush.msra.mxu0 0.0
      %892 = vmatpush.msra.mxu0 %v866
      %893 = vmatmul.f32.gmra.mxu0 %v875
      %v894 = vpop.f32.mrf.mxu0
      %v895 = vadd.f32 0.0, %v894
      %896 = vdwg.mxu0
      %897 = vmatpush.msra.mxu0 0.0
      %898 = vmatpush.msra.mxu0 0.0
      %899 = vmatpush.msra.mxu0 0.0
      %900 = vmatpush.msra.mxu0 0.0
      %901 = vmatpush.msra.mxu0 0.0
      %902 = vmatpush.msra.mxu0 0.0
      %903 = vmatpush.msra.mxu0 0.0
      %904 = vmatpush.msra.mxu0 0.0
      %905 = vmatpush.msra.mxu0 0.0
      %906 = vmatpush.msra.mxu0 0.0
      %907 = vmatpush.msra.mxu0 0.0
      %908 = vmatpush.msra.mxu0 0.0
      %909 = vmatpush.msra.mxu0 0.0
      %910 = vmatpush.msra.mxu0 0.0
      %911 = vmatpush.msra.mxu0 0.0
      %912 = vmatpush.msra.mxu0 %v867
      %913 = vmatmul.f32.gmra.mxu0 %v875
      %v914 = vpop.f32.mrf.mxu0
      %v915 = vadd.f32 0.0, %v914
      %916 = vdwg.mxu0
      %917 = vmatpush.msra.mxu0 0.0
      %918 = vmatpush.msra.mxu0 0.0
      %919 = vmatpush.msra.mxu0 0.0
      %920 = vmatpush.msra.mxu0 0.0
      %921 = vmatpush.msra.mxu0 0.0
      %922 = vmatpush.msra.mxu0 0.0
      %923 = vmatpush.msra.mxu0 0.0
      %924 = vmatpush.msra.mxu0 0.0
      %925 = vmatpush.msra.mxu0 0.0
      %926 = vmatpush.msra.mxu0 0.0
      %927 = vmatpush.msra.mxu0 0.0
      %928 = vmatpush.msra.mxu0 0.0
      %929 = vmatpush.msra.mxu0 0.0
      %930 = vmatpush.msra.mxu0 0.0
      %931 = vmatpush.msra.mxu0 0.0
      %932 = vmatpush.msra.mxu0 %v868
      %933 = vmatmul.f32.gmra.mxu0 %v875
      %v934 = vpop.f32.mrf.mxu0
      %v935 = vadd.f32 0.0, %v934
      %936 = vdwg.mxu0
      %937 = vmatpush.msra.mxu0 0.0
      %938 = vmatpush.msra.mxu0 0.0
      %939 = vmatpush.msra.mxu0 0.0
      %940 = vmatpush.msra.mxu0 0.0
      %941 = vmatpush.msra.mxu0 0.0
      %942 = vmatpush.msra.mxu0 0.0
      %943 = vmatpush.msra.mxu0 0.0
      %944 = vmatpush.msra.mxu0 0.0
      %945 = vmatpush.msra.mxu0 0.0
      %946 = vmatpush.msra.mxu0 0.0
      %947 = vmatpush.msra.mxu0 0.0
      %948 = vmatpush.msra.mxu0 0.0
      %949 = vmatpush.msra.mxu0 0.0
      %950 = vmatpush.msra.mxu0 0.0
      %951 = vmatpush.msra.mxu0 0.0
      %952 = vmatpush.msra.mxu0 %v869
      %953 = vmatmul.f32.gmra.mxu0 %v875
      %v954 = vpop.f32.mrf.mxu0
      %v955 = vadd.f32 0.0, %v954
      %956 = vdwg.mxu0
      %v957 = vadd.f32 %v849, %v895
      %v958 = vadd.f32 %v850, %v915
      %v959 = vadd.f32 %v851, %v935
      %v960 = vadd.f32 %v852, %v955
      %s961 = scalar_lea.vmem %s297, 48
      %v962 = vld [vmem:[%s961] sm:$0xff]
      %963 = vrot.lane.b32.xlu0 %v330, 48
      %v964 = vpop.permute.xlu0 %963
      %965 = vrot.lane.b32.xlu0 %v331, 48
      %v966 = vpop.permute.xlu0 %965
      %967 = vrot.lane.b32.xlu0 %v332, 48
      %v968 = vpop.permute.xlu0 %967
      %969 = vrot.lane.b32.xlu0 %v333, 48
      %v970 = vpop.permute.xlu0 %969
      %971 = vrot.lane.b32.xlu0 %v334, 48
      %v972 = vpop.permute.xlu0 %971
      %vm973 = vcmask 392192
      %v974 = vsel %vm973, %v964, %v966
      %v975 = vsel %vm973, %v966, %v968
      %v976 = vsel %vm973, %v968, %v970
      %v977 = vsel %vm973, %v970, %v972
      %v983 = vsel %vm362, %v962, 0
      %985 = vmatpush.msra.mxu0 0.0
      %986 = vmatpush.msra.mxu0 0.0
      %987 = vmatpush.msra.mxu0 0.0
      %988 = vmatpush.msra.mxu0 0.0
      %989 = vmatpush.msra.mxu0 0.0
      %990 = vmatpush.msra.mxu0 0.0
      %991 = vmatpush.msra.mxu0 0.0
      %992 = vmatpush.msra.mxu0 0.0
      %993 = vmatpush.msra.mxu0 0.0
      %994 = vmatpush.msra.mxu0 0.0
      %995 = vmatpush.msra.mxu0 0.0
      %996 = vmatpush.msra.mxu0 0.0
      %997 = vmatpush.msra.mxu0 0.0
      %998 = vmatpush.msra.mxu0 0.0
      %999 = vmatpush.msra.mxu0 0.0
      %1000 = vmatpush.msra.mxu0 %v974
      %1001 = vmatmul.f32.gmra.mxu0 %v983
      %v1002 = vpop.f32.mrf.mxu0
      %v1003 = vadd.f32 0.0, %v1002
      %1004 = vdwg.mxu0
      %1005 = vmatpush.msra.mxu0 0.0
      %1006 = vmatpush.msra.mxu0 0.0
      %1007 = vmatpush.msra.mxu0 0.0
      %1008 = vmatpush.msra.mxu0 0.0
      %1009 = vmatpush.msra.mxu0 0.0
      %1010 = vmatpush.msra.mxu0 0.0
      %1011 = vmatpush.msra.mxu0 0.0
      %1012 = vmatpush.msra.mxu0 0.0
      %1013 = vmatpush.msra.mxu0 0.0
      %1014 = vmatpush.msra.mxu0 0.0
      %1015 = vmatpush.msra.mxu0 0.0
      %1016 = vmatpush.msra.mxu0 0.0
      %1017 = vmatpush.msra.mxu0 0.0
      %1018 = vmatpush.msra.mxu0 0.0
      %1019 = vmatpush.msra.mxu0 0.0
      %1020 = vmatpush.msra.mxu0 %v975
      %1021 = vmatmul.f32.gmra.mxu0 %v983
      %v1022 = vpop.f32.mrf.mxu0
      %v1023 = vadd.f32 0.0, %v1022
      %1024 = vdwg.mxu0
      %1025 = vmatpush.msra.mxu0 0.0
      %1026 = vmatpush.msra.mxu0 0.0
      %1027 = vmatpush.msra.mxu0 0.0
      %1028 = vmatpush.msra.mxu0 0.0
      %1029 = vmatpush.msra.mxu0 0.0
      %1030 = vmatpush.msra.mxu0 0.0
      %1031 = vmatpush.msra.mxu0 0.0
      %1032 = vmatpush.msra.mxu0 0.0
      %1033 = vmatpush.msra.mxu0 0.0
      %1034 = vmatpush.msra.mxu0 0.0
      %1035 = vmatpush.msra.mxu0 0.0
      %1036 = vmatpush.msra.mxu0 0.0
      %1037 = vmatpush.msra.mxu0 0.0
      %1038 = vmatpush.msra.mxu0 0.0
      %1039 = vmatpush.msra.mxu0 0.0
      %1040 = vmatpush.msra.mxu0 %v976
      %1041 = vmatmul.f32.gmra.mxu0 %v983
      %v1042 = vpop.f32.mrf.mxu0
      %v1043 = vadd.f32 0.0, %v1042
      %1044 = vdwg.mxu0
      %1045 = vmatpush.msra.mxu0 0.0
      %1046 = vmatpush.msra.mxu0 0.0
      %1047 = vmatpush.msra.mxu0 0.0
      %1048 = vmatpush.msra.mxu0 0.0
      %1049 = vmatpush.msra.mxu0 0.0
      %1050 = vmatpush.msra.mxu0 0.0
      %1051 = vmatpush.msra.mxu0 0.0
      %1052 = vmatpush.msra.mxu0 0.0
      %1053 = vmatpush.msra.mxu0 0.0
      %1054 = vmatpush.msra.mxu0 0.0
      %1055 = vmatpush.msra.mxu0 0.0
      %1056 = vmatpush.msra.mxu0 0.0
      %1057 = vmatpush.msra.mxu0 0.0
      %1058 = vmatpush.msra.mxu0 0.0
      %1059 = vmatpush.msra.mxu0 0.0
      %1060 = vmatpush.msra.mxu0 %v977
      %1061 = vmatmul.f32.gmra.mxu0 %v983
      %v1062 = vpop.f32.mrf.mxu0
      %v1063 = vadd.f32 0.0, %v1062
      %1064 = vdwg.mxu0
      %v1065 = vadd.f32 %v957, %v1003
      %v1066 = vadd.f32 %v958, %v1023
      %v1067 = vadd.f32 %v959, %v1043
      %v1068 = vadd.f32 %v960, %v1063
      %s1069 = scalar_lea.vmem %s297, 56
      %v1070 = vld [vmem:[%s1069] sm:$0xff]
      %1071 = vrot.lane.b32.xlu0 %v330, 46
      %v1072 = vpop.permute.xlu0 %1071
      %1073 = vrot.lane.b32.xlu0 %v331, 46
      %v1074 = vpop.permute.xlu0 %1073
      %1075 = vrot.lane.b32.xlu0 %v332, 46
      %v1076 = vpop.permute.xlu0 %1075
      %1077 = vrot.lane.b32.xlu0 %v333, 46
      %v1078 = vpop.permute.xlu0 %1077
      %1079 = vrot.lane.b32.xlu0 %v334, 46
      %v1080 = vpop.permute.xlu0 %1079
      %vm1081 = vcmask 375808
      %v1082 = vsel %vm1081, %v1072, %v1074
      %v1083 = vsel %vm1081, %v1074, %v1076
      %v1084 = vsel %vm1081, %v1076, %v1078
      %v1085 = vsel %vm1081, %v1078, %v1080
      %v1091 = vsel %vm362, %v1070, 0
      %1093 = vmatpush.msra.mxu0 0.0
      %1094 = vmatpush.msra.mxu0 0.0
      %1095 = vmatpush.msra.mxu0 0.0
      %1096 = vmatpush.msra.mxu0 0.0
      %1097 = vmatpush.msra.mxu0 0.0
      %1098 = vmatpush.msra.mxu0 0.0
      %1099 = vmatpush.msra.mxu0 0.0
      %1100 = vmatpush.msra.mxu0 0.0
      %1101 = vmatpush.msra.mxu0 0.0
      %1102 = vmatpush.msra.mxu0 0.0
      %1103 = vmatpush.msra.mxu0 0.0
      %1104 = vmatpush.msra.mxu0 0.0
      %1105 = vmatpush.msra.mxu0 0.0
      %1106 = vmatpush.msra.mxu0 0.0
      %1107 = vmatpush.msra.mxu0 0.0
      %1108 = vmatpush.msra.mxu0 %v1082
      %1109 = vmatmul.f32.gmra.mxu0 %v1091
      %v1110 = vpop.f32.mrf.mxu0
      %v1111 = vadd.f32 0.0, %v1110
      %1112 = vdwg.mxu0
      %1113 = vmatpush.msra.mxu0 0.0
      %1114 = vmatpush.msra.mxu0 0.0
      %1115 = vmatpush.msra.mxu0 0.0
      %1116 = vmatpush.msra.mxu0 0.0
      %1117 = vmatpush.msra.mxu0 0.0
      %1118 = vmatpush.msra.mxu0 0.0
      %1119 = vmatpush.msra.mxu0 0.0
      %1120 = vmatpush.msra.mxu0 0.0
      %1121 = vmatpush.msra.mxu0 0.0
      %1122 = vmatpush.msra.mxu0 0.0
      %1123 = vmatpush.msra.mxu0 0.0
      %1124 = vmatpush.msra.mxu0 0.0
      %1125 = vmatpush.msra.mxu0 0.0
      %1126 = vmatpush.msra.mxu0 0.0
      %1127 = vmatpush.msra.mxu0 0.0
      %1128 = vmatpush.msra.mxu0 %v1083
      %1129 = vmatmul.f32.gmra.mxu0 %v1091
      %v1130 = vpop.f32.mrf.mxu0
      %v1131 = vadd.f32 0.0, %v1130
      %1132 = vdwg.mxu0
      %1133 = vmatpush.msra.mxu0 0.0
      %1134 = vmatpush.msra.mxu0 0.0
      %1135 = vmatpush.msra.mxu0 0.0
      %1136 = vmatpush.msra.mxu0 0.0
      %1137 = vmatpush.msra.mxu0 0.0
      %1138 = vmatpush.msra.mxu0 0.0
      %1139 = vmatpush.msra.mxu0 0.0
      %1140 = vmatpush.msra.mxu0 0.0
      %1141 = vmatpush.msra.mxu0 0.0
      %1142 = vmatpush.msra.mxu0 0.0
      %1143 = vmatpush.msra.mxu0 0.0
      %1144 = vmatpush.msra.mxu0 0.0
      %1145 = vmatpush.msra.mxu0 0.0
      %1146 = vmatpush.msra.mxu0 0.0
      %1147 = vmatpush.msra.mxu0 0.0
      %1148 = vmatpush.msra.mxu0 %v1084
      %1149 = vmatmul.f32.gmra.mxu0 %v1091
      %v1150 = vpop.f32.mrf.mxu0
      %v1151 = vadd.f32 0.0, %v1150
      %1152 = vdwg.mxu0
      %1153 = vmatpush.msra.mxu0 0.0
      %1154 = vmatpush.msra.mxu0 0.0
      %1155 = vmatpush.msra.mxu0 0.0
      %1156 = vmatpush.msra.mxu0 0.0
      %1157 = vmatpush.msra.mxu0 0.0
      %1158 = vmatpush.msra.mxu0 0.0
      %1159 = vmatpush.msra.mxu0 0.0
      %1160 = vmatpush.msra.mxu0 0.0
      %1161 = vmatpush.msra.mxu0 0.0
      %1162 = vmatpush.msra.mxu0 0.0
      %1163 = vmatpush.msra.mxu0 0.0
      %1164 = vmatpush.msra.mxu0 0.0
      %1165 = vmatpush.msra.mxu0 0.0
      %1166 = vmatpush.msra.mxu0 0.0
      %1167 = vmatpush.msra.mxu0 0.0
      %1168 = vmatpush.msra.mxu0 %v1085
      %1169 = vmatmul.f32.gmra.mxu0 %v1091
      %v1170 = vpop.f32.mrf.mxu0
      %v1171 = vadd.f32 0.0, %v1170
      %1172 = vdwg.mxu0
      %v1173 = vadd.f32 %v1065, %v1111
      %v1174 = vadd.f32 %v1066, %v1131
      %v1175 = vadd.f32 %v1067, %v1151
      %v1176 = vadd.f32 %v1068, %v1171
      %s1177 = scalar_lea.vmem %s297, 64
      %v1178 = vld [vmem:[%s1177] sm:$0xff]
      %1179 = vrot.lane.b32.xlu0 %v330, 44
      %v1180 = vpop.permute.xlu0 %1179
      %1181 = vrot.lane.b32.xlu0 %v331, 44
      %v1182 = vpop.permute.xlu0 %1181
      %1183 = vrot.lane.b32.xlu0 %v332, 44
      %v1184 = vpop.permute.xlu0 %1183
      %1185 = vrot.lane.b32.xlu0 %v333, 44
      %v1186 = vpop.permute.xlu0 %1185
      %1187 = vrot.lane.b32.xlu0 %v334, 44
      %v1188 = vpop.permute.xlu0 %1187
      %vm1189 = vcmask 359424
      %v1190 = vsel %vm1189, %v1180, %v1182
      %v1191 = vsel %vm1189, %v1182, %v1184
      %v1192 = vsel %vm1189, %v1184, %v1186
      %v1193 = vsel %vm1189, %v1186, %v1188
      %v1199 = vsel %vm362, %v1178, 0
      %1201 = vmatpush.msra.mxu0 0.0
      %1202 = vmatpush.msra.mxu0 0.0
      %1203 = vmatpush.msra.mxu0 0.0
      %1204 = vmatpush.msra.mxu0 0.0
      %1205 = vmatpush.msra.mxu0 0.0
      %1206 = vmatpush.msra.mxu0 0.0
      %1207 = vmatpush.msra.mxu0 0.0
      %1208 = vmatpush.msra.mxu0 0.0
      %1209 = vmatpush.msra.mxu0 0.0
      %1210 = vmatpush.msra.mxu0 0.0
      %1211 = vmatpush.msra.mxu0 0.0
      %1212 = vmatpush.msra.mxu0 0.0
      %1213 = vmatpush.msra.mxu0 0.0
      %1214 = vmatpush.msra.mxu0 0.0
      %1215 = vmatpush.msra.mxu0 0.0
      %1216 = vmatpush.msra.mxu0 %v1190
      %1217 = vmatmul.f32.gmra.mxu0 %v1199
      %v1218 = vpop.f32.mrf.mxu0
      %v1219 = vadd.f32 0.0, %v1218
      %1220 = vdwg.mxu0
      %1221 = vmatpush.msra.mxu0 0.0
      %1222 = vmatpush.msra.mxu0 0.0
      %1223 = vmatpush.msra.mxu0 0.0
      %1224 = vmatpush.msra.mxu0 0.0
      %1225 = vmatpush.msra.mxu0 0.0
      %1226 = vmatpush.msra.mxu0 0.0
      %1227 = vmatpush.msra.mxu0 0.0
      %1228 = vmatpush.msra.mxu0 0.0
      %1229 = vmatpush.msra.mxu0 0.0
      %1230 = vmatpush.msra.mxu0 0.0
      %1231 = vmatpush.msra.mxu0 0.0
      %1232 = vmatpush.msra.mxu0 0.0
      %1233 = vmatpush.msra.mxu0 0.0
      %1234 = vmatpush.msra.mxu0 0.0
      %1235 = vmatpush.msra.mxu0 0.0
      %1236 = vmatpush.msra.mxu0 %v1191
      %1237 = vmatmul.f32.gmra.mxu0 %v1199
      %v1238 = vpop.f32.mrf.mxu0
      %v1239 = vadd.f32 0.0, %v1238
      %1240 = vdwg.mxu0
      %1241 = vmatpush.msra.mxu0 0.0
      %1242 = vmatpush.msra.mxu0 0.0
      %1243 = vmatpush.msra.mxu0 0.0
      %1244 = vmatpush.msra.mxu0 0.0
      %1245 = vmatpush.msra.mxu0 0.0
      %1246 = vmatpush.msra.mxu0 0.0
      %1247 = vmatpush.msra.mxu0 0.0
      %1248 = vmatpush.msra.mxu0 0.0
      %1249 = vmatpush.msra.mxu0 0.0
      %1250 = vmatpush.msra.mxu0 0.0
      %1251 = vmatpush.msra.mxu0 0.0
      %1252 = vmatpush.msra.mxu0 0.0
      %1253 = vmatpush.msra.mxu0 0.0
      %1254 = vmatpush.msra.mxu0 0.0
      %1255 = vmatpush.msra.mxu0 0.0
      %1256 = vmatpush.msra.mxu0 %v1192
      %1257 = vmatmul.f32.gmra.mxu0 %v1199
      %v1258 = vpop.f32.mrf.mxu0
      %v1259 = vadd.f32 0.0, %v1258
      %1260 = vdwg.mxu0
      %1261 = vmatpush.msra.mxu0 0.0
      %1262 = vmatpush.msra.mxu0 0.0
      %1263 = vmatpush.msra.mxu0 0.0
      %1264 = vmatpush.msra.mxu0 0.0
      %1265 = vmatpush.msra.mxu0 0.0
      %1266 = vmatpush.msra.mxu0 0.0
      %1267 = vmatpush.msra.mxu0 0.0
      %1268 = vmatpush.msra.mxu0 0.0
      %1269 = vmatpush.msra.mxu0 0.0
      %1270 = vmatpush.msra.mxu0 0.0
      %1271 = vmatpush.msra.mxu0 0.0
      %1272 = vmatpush.msra.mxu0 0.0
      %1273 = vmatpush.msra.mxu0 0.0
      %1274 = vmatpush.msra.mxu0 0.0
      %1275 = vmatpush.msra.mxu0 0.0
      %1276 = vmatpush.msra.mxu0 %v1193
      %1277 = vmatmul.f32.gmra.mxu0 %v1199
      %v1278 = vpop.f32.mrf.mxu0
      %v1279 = vadd.f32 0.0, %v1278
      %1280 = vdwg.mxu0
      %v1281 = vadd.f32 %v1173, %v1219
      %v1282 = vadd.f32 %v1174, %v1239
      %v1283 = vadd.f32 %v1175, %v1259
      %v1284 = vadd.f32 %v1176, %v1279
      %v1285 = vld [vmem:[%s315] sm:$0xff]
      %1287 = vset.pattern.permute.xlu0 0
      %1288 = vperm.xlu0 %1287, %v1285
      %v1289 = vpop.permute.xlu0 %1288
      %v1291 = vmul.f32 %v1281, %v1289
      %v1292 = vmul.f32 %v1282, %v1289
      %v1293 = vmul.f32 %v1283, %v1289
      %v1294 = vmul.f32 %v1284, %v1289
      %v1295 = vld [vmem:[%s319] sm:$0xff]
      %1297 = vset.pattern.permute.xlu0 0
      %1298 = vperm.xlu0 %1297, %v1295
      %v1299 = vpop.permute.xlu0 %1298
      %v1301 = vadd.f32 %v1291, %v1299
      %v1302 = vadd.f32 %v1292, %v1299
      %v1303 = vadd.f32 %v1293, %v1299
      %v1304 = vadd.f32 %v1294, %v1299
      %v1305 = vmax.f32 %v1301, 0.0
      %v1306 = vmax.f32 %v1302, 0.0
      %v1307 = vmax.f32 %v1303, 0.0
      %v1308 = vmax.f32 %v1304, 0.0
      %1309 = vst [vmem:[%s328] sm:$0xff] %v1305
      %1310 = vst [vmem:[%s328 + $0x8] sm:$0xff] %v1306
      %1311 = vst [vmem:[%s328 + $0x10] sm:$0xff] %v1307
      %1312 = vst [vmem:[%s328 + $0x18] sm:$0xff] %v1308
      %s1313 = smul.u32 4, %s21
      %p1314 = scmp.lt.s32.totalorder %s20, 0
      %s1315 = scalar_select %p1314, %s20, 0
      %p1316 = scmp.lt.s32.totalorder %s1313, 7
      %s1317 = scalar_select %p1316, %s1313, 7
      %s1318 = smul.addr %s1315, 8
      %s1319 = sadd.s32 %s1317, %s1318
      %s1320 = smul.addr %s1319, 8
      %s1321 = scalar_lea.vmem %s5, %s1320
      // Predicated region
      $region41: #{atr_conv.3} parent=39 // pred_check
        %p1322 = pneg %p180
      $region42: #{atr_conv.3} parent=39 // pred_check_branch
        %1324 = sbr.rel (%p1322) target = $region44
      $region43: #{atr_conv.3} parent=39 // pred_region
        %s1325 = smul.u32 4, %s21
      $region44: #{atr_conv.3} parent=39 // pred_fallthru
        _
    $region40: #{atr_conv.3} parent=5 // pred_fallthru
      _
    %p1326 = scmp.le.s32.totalorder 2, %s11
    // Predicated region
    $region45: #{atr_conv.3} parent=5 // pred_check
      %p1327 = pneg %p1326
    $region46: #{atr_conv.3} parent=5 // pred_check_branch
      %1329 = sbr.rel (%p1327) target = $region48
    $region47: #{atr_conv.3} parent=5 // pred_region
      %s1330 = ssub.s32 %s11, 2
      // Predicated region
      $region49: #{atr_conv.3} parent=47 // pred_check
        %p1331 = pneg %p186
      $region50: #{atr_conv.3} parent=47 // pred_check_branch
        %1333 = sbr.rel (%p1331) target = $region52
      $region51: #{atr_conv.3} parent=47 // pred_region
        %s1334 = smul.u32 4, %s23
        %p1335 = scmp.lt.s32.totalorder %s22, 0
        %s1336 = scalar_select %p1335, %s22, 0
        %p1337 = scmp.lt.s32.totalorder %s1334, 7
        %s1338 = scalar_select %p1337, %s1334, 7
        %s1339 = smul.addr %s1336, 8
        %s1340 = sadd.s32 %s1338, %s1339
        %s1341 = smul.addr %s1340, 8
        %s1342 = scalar_lea.vmem %s5, %s1341
      $region52: #{atr_conv.3} parent=47 // pred_fallthru
        _
    $region48: #{atr_conv.3} parent=5 // pred_fallthru
      _
  $region6: #{atr_conv.3} parent=0 // loop_footer
    %s15 = sadd.s32 1, %s11
  $region7: #{atr_conv.3} parent=0 // loop_footer_branch
    %10 = sbr.rel target = $region3
  $region8: #{atr_conv.3} parent=0 // loop_exit
    _

</llo_original>
